<compile_context>
chip_gen: v6e
topology: v6e:2x2x1
jax: 0.10.0
libtpu: 0.0.40
codegen_flags: <defaults>
</compile_context>

<pallas_src>
import math
import functools

import jax
import jax.numpy as jnp
from jax import lax
from jax.experimental import pallas as pl
from jax.experimental.pallas import tpu as pltpu


def _bert_attention_kernel(num_heads, head_dim, ln_eps,
                           x_ref,
                           wq_ref, bq_ref,
                           wk_ref, bk_ref,
                           wv_ref, bv_ref,
                           wo_ref, bo_ref,
                           gamma_ref, beta_ref,
                           out_ref,
                           ctx_ref):
    # x block: (1, S, H)
    x_f32 = x_ref[0].astype(jnp.float32)          # residual / LN path stays f32
    x_bf = x_f32.astype(jnp.bfloat16)             # matmul operand

    # Hoisted (1, H) broadcasts — loaded exactly once (kept in f32).
    bq = bq_ref[0]
    bk = bk_ref[0]
    bv = bv_ref[0]
    bo = bo_ref[0]
    gamma = gamma_ref[0]
    beta = beta_ref[0]

    # --- fused QKV projections: bf16 operands, f32 accumulation, full K=H depth
    q = (jnp.dot(x_bf, wq_ref[...], preferred_element_type=jnp.float32)
         + bq).astype(jnp.bfloat16)
    k = (jnp.dot(x_bf, wk_ref[...], preferred_element_type=jnp.float32)
         + bk).astype(jnp.bfloat16)
    v = (jnp.dot(x_bf, wv_ref[...], preferred_element_type=jnp.float32)
         + bv).astype(jnp.bfloat16)

    inv_sqrt_d = 1.0 / math.sqrt(head_dim)

    # --- per-head scaled dot-product attention; each head's context is written
    #     straight into the VMEM scratch slab (no concatenate, bounded live
    #     ranges, single full-depth output GEMM afterwards).
    for h in range(num_heads):
        lo = h * head_dim
        qh = q[:, lo:lo + head_dim]               # (S, d) bf16
        kh = k[:, lo:lo + head_dim]               # (S, d) bf16
        vh = v[:, lo:lo + head_dim]               # (S, d) bf16

        # q @ k^T without an explicit transpose: contract the head dim of both.
        scores = lax.dot_general(
            qh, kh,
            dimension_numbers=(((1,), (1,)), ((), ())),
            preferred_element_type=jnp.float32) * inv_sqrt_d       # (S, S) f32

        scores = scores - jnp.max(scores, axis=-1, keepdims=True)
        e = jnp.exp(scores)
        probs = e * pl.reciprocal(jnp.sum(e, axis=-1, keepdims=True), approx=True)

        ctx_h = jnp.dot(probs.astype(jnp.bfloat16), vh,
                        preferred_element_type=jnp.float32)         # (S, d) f32
        ctx_ref[:, lo:lo + head_dim] = ctx_h.astype(jnp.bfloat16)

    # --- output dense (single K=H GEMM from the scratch) + residual + LayerNorm
    proj = jnp.dot(ctx_ref[...], wo_ref[...],
                   preferred_element_type=jnp.float32) + bo         # (S, H) f32
    y = proj + x_f32
    mean = jnp.mean(y, axis=-1, keepdims=True)
    var = jnp.mean((y - mean) ** 2, axis=-1, keepdims=True)
    y_norm = (y - mean) * lax.rsqrt(var + ln_eps)
    y_norm = y_norm * gamma + beta

    out_ref[0] = y_norm.astype(out_ref.dtype)


def bert_attention(x, params, *, num_heads, ln_eps=1e-12):
    """x: [B, S, H] float32. Returns [B, S, H] (same semantics as BertAttention
    forward with default arguments, eval mode)."""
    B, S, H = x.shape
    head_dim = H // num_heads

    kernel = functools.partial(_bert_attention_kernel, num_heads, head_dim, ln_eps)

    # Weights go in as bf16 (MXU-native, half the VMEM footprint); biases and
    # LayerNorm params stay f32.
    wq = params["wq_t"].astype(jnp.bfloat16)
    wk = params["wk_t"].astype(jnp.bfloat16)
    wv = params["wv_t"].astype(jnp.bfloat16)
    wo = params["wo_t"].astype(jnp.bfloat16)

    full = lambda shape: pl.BlockSpec(shape, lambda b: (0, 0))
    xspec = pl.BlockSpec((1, S, H), lambda b: (b, 0, 0))

    return pl.pallas_call(
        kernel,
        out_shape=jax.ShapeDtypeStruct((B, S, H), x.dtype),
        grid_spec=pltpu.PrefetchScalarGridSpec(
            num_scalar_prefetch=0,
            grid=(B,),
            in_specs=[
                xspec,
                full((H, H)), full((1, H)),   # Wq^T (bf16), bq (f32)
                full((H, H)), full((1, H)),   # Wk^T, bk
                full((H, H)), full((1, H)),   # Wv^T, bv
                full((H, H)), full((1, H)),   # Wo^T, bo
                full((1, H)), full((1, H)),   # LN gamma, beta
            ],
            out_specs=xspec,
            scratch_shapes=[pltpu.VMEM((S, H), jnp.bfloat16)],  # per-head context slab
        ),
        compiler_params=pltpu.CompilerParams(
            dimension_semantics=("parallel",),
            vmem_limit_bytes=48 * 1024 * 1024),
    )(x,
      wq, params["bq"],
      wk, params["bk"],
      wv, params["bv"],
      wo, params["bo"],
      params["gamma"], params["beta"])


def _reference(x, params, num_heads, ln_eps=1e-12):
    """Pure-JAX f32 reference of the PyTorch forward (eval mode, no mask)."""
    B, S, H = x.shape
    d = H // num_heads
    q = x @ params["wq_t"] + params["bq"][0]
    k = x @ params["wk_t"] + params["bk"][0]
    v = x @ params["wv_t"] + params["bv"][0]

    def split(t):  # (B,S,H) -> (B,nh,S,d)
        return t.reshape(B, S, num_heads, d).transpose(0, 2, 1, 3)

    qh, kh, vh = split(q), split(k), split(v)
    scores = jnp.einsum("bhld,bhrd->bhlr", qh, kh) / math.sqrt(d)
    probs = jax.nn.softmax(scores, axis=-1)
    ctx = jnp.einsum("bhlr,bhrd->bhld", probs, vh)
    ctx = ctx.transpose(0, 2, 1, 3).reshape(B, S, H)
    proj = ctx @ params["wo_t"] + params["bo"][0]
    y = proj + x
    mean = y.mean(-1, keepdims=True)
    var = ((y - mean) ** 2).mean(-1, keepdims=True)
    return (y - mean) / jnp.sqrt(var + ln_eps) * params["gamma"][0] + params["beta"][0]


if __name__ == "__main__":
    # small config: hidden=32, heads=4, seq=8, batch=2
    B, S, H, NH = 2, 8, 32, 4
    key = jax.random.PRNGKey(0)
    ks = jax.random.split(key, 10)

    scale = 0.05
    params = {
        "wq_t": scale * jax.random.normal(ks[0], (H, H), jnp.float32),
        "bq":   scale * jax.random.normal(ks[1], (1, H), jnp.float32),
        "wk_t": scale * jax.random.normal(ks[2], (H, H), jnp.float32),
        "bk":   scale * jax.random.normal(ks[3], (1, H), jnp.float32),
        "wv_t": scale * jax.random.normal(ks[4], (H, H), jnp.float32),
        "bv":   scale * jax.random.normal(ks[5], (1, H), jnp.float32),
        "wo_t": scale * jax.random.normal(ks[6], (H, H), jnp.float32),
        "bo":   scale * jax.random.normal(ks[7], (1, H), jnp.float32),
        "gamma": jnp.ones((1, H), jnp.float32),
        "beta":  jnp.zeros((1, H), jnp.float32),
    }

    x = jax.random.normal(ks[8], (B, S, H), jnp.float32)

    out = bert_attention(x, params, num_heads=NH)
    out = jax.block_until_ready(out)

    ref = _reference(x, params, NH)
    assert out.shape == (B, S, H)
    # bf16 matmul operands with f32 accumulation -> relaxed tolerance vs f32 ref
    assert jnp.max(jnp.abs(out - ref)) < 2e-2, "mismatch vs pure-JAX reference"

    print("KERNEL_OK")
</pallas_src>

<mosaic_0001>
module attributes {stable_mosaic.version = 11 : i64} {
  func.func @_bert_attention_kernel(%arg0: i32, %arg1: memref<1x8x32xf32, #tpu.memory_space<vmem>>, %arg2: memref<32x32xbf16, #tpu.memory_space<vmem>>, %arg3: memref<1x32xf32, #tpu.memory_space<vmem>>, %arg4: memref<32x32xbf16, #tpu.memory_space<vmem>>, %arg5: memref<1x32xf32, #tpu.memory_space<vmem>>, %arg6: memref<32x32xbf16, #tpu.memory_space<vmem>>, %arg7: memref<1x32xf32, #tpu.memory_space<vmem>>, %arg8: memref<32x32xbf16, #tpu.memory_space<vmem>>, %arg9: memref<1x32xf32, #tpu.memory_space<vmem>>, %arg10: memref<1x32xf32, #tpu.memory_space<vmem>>, %arg11: memref<1x32xf32, #tpu.memory_space<vmem>>, %arg12: memref<1x8x32xf32, #tpu.memory_space<vmem>>, %arg13: memref<8x32xbf16, #tpu.memory_space<vmem>>) attributes {dimension_semantics = [#tpu.dimension_semantics<parallel>], iteration_bounds = array<i64: 2>, scalar_prefetch = 0 : i64, scratch_operands = 1 : i64, tpu.core_type = #tpu.core_type<tc>, window_params = [{transform_indices = @transform_0, window_bounds = array<i64: 1, 8, 32>}, {pipeline_mode = #tpu.pipeline_mode<synchronous>, transform_indices = @transform_1, window_bounds = array<i64: 32, 32>}, {pipeline_mode = #tpu.pipeline_mode<synchronous>, transform_indices = @transform_2, window_bounds = array<i64: 1, 32>}, {pipeline_mode = #tpu.pipeline_mode<synchronous>, transform_indices = @transform_3, window_bounds = array<i64: 32, 32>}, {pipeline_mode = #tpu.pipeline_mode<synchronous>, transform_indices = @transform_4, window_bounds = array<i64: 1, 32>}, {pipeline_mode = #tpu.pipeline_mode<synchronous>, transform_indices = @transform_5, window_bounds = array<i64: 32, 32>}, {pipeline_mode = #tpu.pipeline_mode<synchronous>, transform_indices = @transform_6, window_bounds = array<i64: 1, 32>}, {pipeline_mode = #tpu.pipeline_mode<synchronous>, transform_indices = @transform_7, window_bounds = array<i64: 32, 32>}, {pipeline_mode = #tpu.pipeline_mode<synchronous>, transform_indices = @transform_8, window_bounds = array<i64: 1, 32>}, {pipeline_mode = #tpu.pipeline_mode<synchronous>, transform_indices = @transform_9, window_bounds = array<i64: 1, 32>}, {pipeline_mode = #tpu.pipeline_mode<synchronous>, transform_indices = @transform_10, window_bounds = array<i64: 1, 32>}, {transform_indices = @transform_11, window_bounds = array<i64: 1, 8, 32>}]} {
    %c0 = arith.constant 0 : index
    %c0_0 = arith.constant 0 : index
    %c0_1 = arith.constant 0 : index
    %0 = vector.load %arg1[%c0, %c0_0, %c0_1] : memref<1x8x32xf32, #tpu.memory_space<vmem>>, vector<1x8x32xf32>
    %1 = vector.shape_cast %0 : vector<1x8x32xf32> to vector<8x32xf32>
    %2 = arith.truncf %1 : vector<8x32xf32> to vector<8x32xbf16>
    %c0_2 = arith.constant 0 : index
    %c0_3 = arith.constant 0 : index
    %3 = vector.load %arg3[%c0_2, %c0_3] : memref<1x32xf32, #tpu.memory_space<vmem>>, vector<1x32xf32>
    %4 = vector.shape_cast %3 : vector<1x32xf32> to vector<32xf32>
    %c0_4 = arith.constant 0 : index
    %c0_5 = arith.constant 0 : index
    %5 = vector.load %arg5[%c0_4, %c0_5] : memref<1x32xf32, #tpu.memory_space<vmem>>, vector<1x32xf32>
    %6 = vector.shape_cast %5 : vector<1x32xf32> to vector<32xf32>
    %c0_6 = arith.constant 0 : index
    %c0_7 = arith.constant 0 : index
    %7 = vector.load %arg7[%c0_6, %c0_7] : memref<1x32xf32, #tpu.memory_space<vmem>>, vector<1x32xf32>
    %8 = vector.shape_cast %7 : vector<1x32xf32> to vector<32xf32>
    %c0_8 = arith.constant 0 : index
    %c0_9 = arith.constant 0 : index
    %9 = vector.load %arg9[%c0_8, %c0_9] : memref<1x32xf32, #tpu.memory_space<vmem>>, vector<1x32xf32>
    %10 = vector.shape_cast %9 : vector<1x32xf32> to vector<32xf32>
    %c0_10 = arith.constant 0 : index
    %c0_11 = arith.constant 0 : index
    %11 = vector.load %arg10[%c0_10, %c0_11] : memref<1x32xf32, #tpu.memory_space<vmem>>, vector<1x32xf32>
    %12 = vector.shape_cast %11 : vector<1x32xf32> to vector<32xf32>
    %c0_12 = arith.constant 0 : index
    %c0_13 = arith.constant 0 : index
    %13 = vector.load %arg11[%c0_12, %c0_13] : memref<1x32xf32, #tpu.memory_space<vmem>>, vector<1x32xf32>
    %14 = vector.shape_cast %13 : vector<1x32xf32> to vector<32xf32>
    %c0_14 = arith.constant 0 : index
    %c0_15 = arith.constant 0 : index
    %15 = vector.load %arg2[%c0_14, %c0_15] : memref<32x32xbf16, #tpu.memory_space<vmem>>, vector<32x32xbf16>
    %cst = arith.constant dense<0.000000e+00> : vector<8x32xf32>
    %16 = tpu.matmul %2, %15, %cst {dimension_numbers = #tpu.dot_dimension_numbers<[1], [0], [0], [1], [0, 0, 1, 1], [], []>} : vector<8x32xbf16>, vector<32x32xbf16>, vector<8x32xf32> -> vector<8x32xf32>
    %17 = vector.shape_cast %4 : vector<32xf32> to vector<1x32xf32>
    %18 = vector.broadcast %17 : vector<1x32xf32> to vector<8x32xf32>
    %19 = arith.addf %16, %18 : vector<8x32xf32>
    %20 = arith.truncf %19 : vector<8x32xf32> to vector<8x32xbf16>
    %c0_16 = arith.constant 0 : index
    %c0_17 = arith.constant 0 : index
    %21 = vector.load %arg4[%c0_16, %c0_17] : memref<32x32xbf16, #tpu.memory_space<vmem>>, vector<32x32xbf16>
    %cst_18 = arith.constant dense<0.000000e+00> : vector<8x32xf32>
    %22 = tpu.matmul %2, %21, %cst_18 {dimension_numbers = #tpu.dot_dimension_numbers<[1], [0], [0], [1], [0, 0, 1, 1], [], []>} : vector<8x32xbf16>, vector<32x32xbf16>, vector<8x32xf32> -> vector<8x32xf32>
    %23 = vector.shape_cast %6 : vector<32xf32> to vector<1x32xf32>
    %24 = vector.broadcast %23 : vector<1x32xf32> to vector<8x32xf32>
    %25 = arith.addf %22, %24 : vector<8x32xf32>
    %26 = arith.truncf %25 : vector<8x32xf32> to vector<8x32xbf16>
    %c0_19 = arith.constant 0 : index
    %c0_20 = arith.constant 0 : index
    %27 = vector.load %arg6[%c0_19, %c0_20] : memref<32x32xbf16, #tpu.memory_space<vmem>>, vector<32x32xbf16>
    %cst_21 = arith.constant dense<0.000000e+00> : vector<8x32xf32>
    %28 = tpu.matmul %2, %27, %cst_21 {dimension_numbers = #tpu.dot_dimension_numbers<[1], [0], [0], [1], [0, 0, 1, 1], [], []>} : vector<8x32xbf16>, vector<32x32xbf16>, vector<8x32xf32> -> vector<8x32xf32>
    %29 = vector.shape_cast %8 : vector<32xf32> to vector<1x32xf32>
    %30 = vector.broadcast %29 : vector<1x32xf32> to vector<8x32xf32>
    %31 = arith.addf %28, %30 : vector<8x32xf32>
    %32 = arith.truncf %31 : vector<8x32xf32> to vector<8x32xbf16>
    %33 = vector.extract_strided_slice %20 {offsets = [0, 0], sizes = [8, 8], strides = [1, 1]} : vector<8x32xbf16> to vector<8x8xbf16>
    %34 = vector.extract_strided_slice %26 {offsets = [0, 0], sizes = [8, 8], strides = [1, 1]} : vector<8x32xbf16> to vector<8x8xbf16>
    %35 = vector.extract_strided_slice %32 {offsets = [0, 0], sizes = [8, 8], strides = [1, 1]} : vector<8x32xbf16> to vector<8x8xbf16>
    %cst_22 = arith.constant dense<0.000000e+00> : vector<8x8xf32>
    %36 = tpu.matmul %33, %34, %cst_22 {dimension_numbers = #tpu.dot_dimension_numbers<[1], [1], [0], [0], [0, 0, 1, 0], [], []>} : vector<8x8xbf16>, vector<8x8xbf16>, vector<8x8xf32> -> vector<8x8xf32>
    %cst_23 = arith.constant 0.353553385 : f32
    %37 = vector.broadcast %cst_23 : f32 to vector<8x8xf32>
    %38 = arith.mulf %36, %37 : vector<8x8xf32>
    %cst_24 = arith.constant dense<0xFF800000> : vector<8xf32>
    %39 = vector.multi_reduction <maximumf>, %38, %cst_24 [1] : vector<8x8xf32> to vector<8xf32>
    %40 = vector.shape_cast %39 : vector<8xf32> to vector<8x1xf32>
    %41 = vector.broadcast %40 : vector<8x1xf32> to vector<8x8xf32>
    %42 = arith.subf %38, %41 : vector<8x8xf32>
    %43 = math.exp %42 : vector<8x8xf32>
    %cst_25 = arith.constant dense<0.000000e+00> : vector<8xf32>
    %44 = vector.multi_reduction <add>, %43, %cst_25 [1] : vector<8x8xf32> to vector<8xf32>
    %45 = vector.shape_cast %44 : vector<8xf32> to vector<8x1xf32>
    %46 = tpu.reciprocal %45 {approx = true} : vector<8x1xf32> -> vector<8x1xf32>
    %47 = vector.broadcast %46 : vector<8x1xf32> to vector<8x8xf32>
    %48 = arith.mulf %43, %47 : vector<8x8xf32>
    %49 = arith.truncf %48 : vector<8x8xf32> to vector<8x8xbf16>
    %cst_26 = arith.constant dense<0.000000e+00> : vector<8x8xf32>
    %50 = tpu.matmul %49, %35, %cst_26 {dimension_numbers = #tpu.dot_dimension_numbers<[1], [0], [0], [1], [0, 0, 1, 1], [], []>} : vector<8x8xbf16>, vector<8x8xbf16>, vector<8x8xf32> -> vector<8x8xf32>
    %51 = arith.truncf %50 : vector<8x8xf32> to vector<8x8xbf16>
    %c0_27 = arith.constant 0 : index
    %c0_28 = arith.constant 0 : index
    %52 = vector.load %arg13[%c0_27, %c0_28] : memref<8x32xbf16, #tpu.memory_space<vmem>>, vector<8x8xbf16>
    tpu.vector_store %arg13[%c0_27, %c0_28], %51 {strides = array<i32>} : memref<8x32xbf16, #tpu.memory_space<vmem>>, vector<8x8xbf16>,
    %53 = vector.extract_strided_slice %20 {offsets = [0, 8], sizes = [8, 8], strides = [1, 1]} : vector<8x32xbf16> to vector<8x8xbf16>
    %54 = vector.extract_strided_slice %26 {offsets = [0, 8], sizes = [8, 8], strides = [1, 1]} : vector<8x32xbf16> to vector<8x8xbf16>
    %55 = vector.extract_strided_slice %32 {offsets = [0, 8], sizes = [8, 8], strides = [1, 1]} : vector<8x32xbf16> to vector<8x8xbf16>
    %cst_29 = arith.constant dense<0.000000e+00> : vector<8x8xf32>
    %56 = tpu.matmul %53, %54, %cst_29 {dimension_numbers = #tpu.dot_dimension_numbers<[1], [1], [0], [0], [0, 0, 1, 0], [], []>} : vector<8x8xbf16>, vector<8x8xbf16>, vector<8x8xf32> -> vector<8x8xf32>
    %cst_30 = arith.constant 0.353553385 : f32
    %57 = vector.broadcast %cst_30 : f32 to vector<8x8xf32>
    %58 = arith.mulf %56, %57 : vector<8x8xf32>
    %cst_31 = arith.constant dense<0xFF800000> : vector<8xf32>
    %59 = vector.multi_reduction <maximumf>, %58, %cst_31 [1] : vector<8x8xf32> to vector<8xf32>
    %60 = vector.shape_cast %59 : vector<8xf32> to vector<8x1xf32>
    %61 = vector.broadcast %60 : vector<8x1xf32> to vector<8x8xf32>
    %62 = arith.subf %58, %61 : vector<8x8xf32>
    %63 = math.exp %62 : vector<8x8xf32>
    %cst_32 = arith.constant dense<0.000000e+00> : vector<8xf32>
    %64 = vector.multi_reduction <add>, %63, %cst_32 [1] : vector<8x8xf32> to vector<8xf32>
    %65 = vector.shape_cast %64 : vector<8xf32> to vector<8x1xf32>
    %66 = tpu.reciprocal %65 {approx = true} : vector<8x1xf32> -> vector<8x1xf32>
    %67 = vector.broadcast %66 : vector<8x1xf32> to vector<8x8xf32>
    %68 = arith.mulf %63, %67 : vector<8x8xf32>
    %69 = arith.truncf %68 : vector<8x8xf32> to vector<8x8xbf16>
    %cst_33 = arith.constant dense<0.000000e+00> : vector<8x8xf32>
    %70 = tpu.matmul %69, %55, %cst_33 {dimension_numbers = #tpu.dot_dimension_numbers<[1], [0], [0], [1], [0, 0, 1, 1], [], []>} : vector<8x8xbf16>, vector<8x8xbf16>, vector<8x8xf32> -> vector<8x8xf32>
    %71 = arith.truncf %70 : vector<8x8xf32> to vector<8x8xbf16>
    %c0_34 = arith.constant 0 : index
    %c8 = arith.constant 8 : index
    %72 = vector.load %arg13[%c0_34, %c8] : memref<8x32xbf16, #tpu.memory_space<vmem>>, vector<8x8xbf16>
    tpu.vector_store %arg13[%c0_34, %c8], %71 {strides = array<i32>} : memref<8x32xbf16, #tpu.memory_space<vmem>>, vector<8x8xbf16>,
    %73 = vector.extract_strided_slice %20 {offsets = [0, 16], sizes = [8, 8], strides = [1, 1]} : vector<8x32xbf16> to vector<8x8xbf16>
    %74 = vector.extract_strided_slice %26 {offsets = [0, 16], sizes = [8, 8], strides = [1, 1]} : vector<8x32xbf16> to vector<8x8xbf16>
    %75 = vector.extract_strided_slice %32 {offsets = [0, 16], sizes = [8, 8], strides = [1, 1]} : vector<8x32xbf16> to vector<8x8xbf16>
    %cst_35 = arith.constant dense<0.000000e+00> : vector<8x8xf32>
    %76 = tpu.matmul %73, %74, %cst_35 {dimension_numbers = #tpu.dot_dimension_numbers<[1], [1], [0], [0], [0, 0, 1, 0], [], []>} : vector<8x8xbf16>, vector<8x8xbf16>, vector<8x8xf32> -> vector<8x8xf32>
    %cst_36 = arith.constant 0.353553385 : f32
    %77 = vector.broadcast %cst_36 : f32 to vector<8x8xf32>
    %78 = arith.mulf %76, %77 : vector<8x8xf32>
    %cst_37 = arith.constant dense<0xFF800000> : vector<8xf32>
    %79 = vector.multi_reduction <maximumf>, %78, %cst_37 [1] : vector<8x8xf32> to vector<8xf32>
    %80 = vector.shape_cast %79 : vector<8xf32> to vector<8x1xf32>
    %81 = vector.broadcast %80 : vector<8x1xf32> to vector<8x8xf32>
    %82 = arith.subf %78, %81 : vector<8x8xf32>
    %83 = math.exp %82 : vector<8x8xf32>
    %cst_38 = arith.constant dense<0.000000e+00> : vector<8xf32>
    %84 = vector.multi_reduction <add>, %83, %cst_38 [1] : vector<8x8xf32> to vector<8xf32>
    %85 = vector.shape_cast %84 : vector<8xf32> to vector<8x1xf32>
    %86 = tpu.reciprocal %85 {approx = true} : vector<8x1xf32> -> vector<8x1xf32>
    %87 = vector.broadcast %86 : vector<8x1xf32> to vector<8x8xf32>
    %88 = arith.mulf %83, %87 : vector<8x8xf32>
    %89 = arith.truncf %88 : vector<8x8xf32> to vector<8x8xbf16>
    %cst_39 = arith.constant dense<0.000000e+00> : vector<8x8xf32>
    %90 = tpu.matmul %89, %75, %cst_39 {dimension_numbers = #tpu.dot_dimension_numbers<[1], [0], [0], [1], [0, 0, 1, 1], [], []>} : vector<8x8xbf16>, vector<8x8xbf16>, vector<8x8xf32> -> vector<8x8xf32>
    %91 = arith.truncf %90 : vector<8x8xf32> to vector<8x8xbf16>
    %c0_40 = arith.constant 0 : index
    %c16 = arith.constant 16 : index
    %92 = vector.load %arg13[%c0_40, %c16] : memref<8x32xbf16, #tpu.memory_space<vmem>>, vector<8x8xbf16>
    tpu.vector_store %arg13[%c0_40, %c16], %91 {strides = array<i32>} : memref<8x32xbf16, #tpu.memory_space<vmem>>, vector<8x8xbf16>,
    %93 = vector.extract_strided_slice %20 {offsets = [0, 24], sizes = [8, 8], strides = [1, 1]} : vector<8x32xbf16> to vector<8x8xbf16>
    %94 = vector.extract_strided_slice %26 {offsets = [0, 24], sizes = [8, 8], strides = [1, 1]} : vector<8x32xbf16> to vector<8x8xbf16>
    %95 = vector.extract_strided_slice %32 {offsets = [0, 24], sizes = [8, 8], strides = [1, 1]} : vector<8x32xbf16> to vector<8x8xbf16>
    %cst_41 = arith.constant dense<0.000000e+00> : vector<8x8xf32>
    %96 = tpu.matmul %93, %94, %cst_41 {dimension_numbers = #tpu.dot_dimension_numbers<[1], [1], [0], [0], [0, 0, 1, 0], [], []>} : vector<8x8xbf16>, vector<8x8xbf16>, vector<8x8xf32> -> vector<8x8xf32>
    %cst_42 = arith.constant 0.353553385 : f32
    %97 = vector.broadcast %cst_42 : f32 to vector<8x8xf32>
    %98 = arith.mulf %96, %97 : vector<8x8xf32>
    %cst_43 = arith.constant dense<0xFF800000> : vector<8xf32>
    %99 = vector.multi_reduction <maximumf>, %98, %cst_43 [1] : vector<8x8xf32> to vector<8xf32>
    %100 = vector.shape_cast %99 : vector<8xf32> to vector<8x1xf32>
    %101 = vector.broadcast %100 : vector<8x1xf32> to vector<8x8xf32>
    %102 = arith.subf %98, %101 : vector<8x8xf32>
    %103 = math.exp %102 : vector<8x8xf32>
    %cst_44 = arith.constant dense<0.000000e+00> : vector<8xf32>
    %104 = vector.multi_reduction <add>, %103, %cst_44 [1] : vector<8x8xf32> to vector<8xf32>
    %105 = vector.shape_cast %104 : vector<8xf32> to vector<8x1xf32>
    %106 = tpu.reciprocal %105 {approx = true} : vector<8x1xf32> -> vector<8x1xf32>
    %107 = vector.broadcast %106 : vector<8x1xf32> to vector<8x8xf32>
    %108 = arith.mulf %103, %107 : vector<8x8xf32>
    %109 = arith.truncf %108 : vector<8x8xf32> to vector<8x8xbf16>
    %cst_45 = arith.constant dense<0.000000e+00> : vector<8x8xf32>
    %110 = tpu.matmul %109, %95, %cst_45 {dimension_numbers = #tpu.dot_dimension_numbers<[1], [0], [0], [1], [0, 0, 1, 1], [], []>} : vector<8x8xbf16>, vector<8x8xbf16>, vector<8x8xf32> -> vector<8x8xf32>
    %111 = arith.truncf %110 : vector<8x8xf32> to vector<8x8xbf16>
    %c0_46 = arith.constant 0 : index
    %c24 = arith.constant 24 : index
    %112 = vector.load %arg13[%c0_46, %c24] : memref<8x32xbf16, #tpu.memory_space<vmem>>, vector<8x8xbf16>
    tpu.vector_store %arg13[%c0_46, %c24], %111 {strides = array<i32>} : memref<8x32xbf16, #tpu.memory_space<vmem>>, vector<8x8xbf16>,
    %c0_47 = arith.constant 0 : index
    %c0_48 = arith.constant 0 : index
    %113 = vector.load %arg13[%c0_47, %c0_48] : memref<8x32xbf16, #tpu.memory_space<vmem>>, vector<8x32xbf16>
    %c0_49 = arith.constant 0 : index
    %c0_50 = arith.constant 0 : index
    %114 = vector.load %arg8[%c0_49, %c0_50] : memref<32x32xbf16, #tpu.memory_space<vmem>>, vector<32x32xbf16>
    %cst_51 = arith.constant dense<0.000000e+00> : vector<8x32xf32>
    %115 = tpu.matmul %113, %114, %cst_51 {dimension_numbers = #tpu.dot_dimension_numbers<[1], [0], [0], [1], [0, 0, 1, 1], [], []>} : vector<8x32xbf16>, vector<32x32xbf16>, vector<8x32xf32> -> vector<8x32xf32>
    %116 = vector.shape_cast %10 : vector<32xf32> to vector<1x32xf32>
    %117 = vector.broadcast %116 : vector<1x32xf32> to vector<8x32xf32>
    %118 = arith.addf %115, %117 : vector<8x32xf32>
    %119 = arith.addf %118, %1 : vector<8x32xf32>
    %cst_52 = arith.constant dense<0.000000e+00> : vector<8xf32>
    %120 = vector.multi_reduction <add>, %119, %cst_52 [1] : vector<8x32xf32> to vector<8xf32>
    %121 = vector.shape_cast %120 : vector<8xf32> to vector<8x1xf32>
    %cst_53 = arith.constant 3.200000e+01 : f32
    %122 = vector.broadcast %cst_53 : f32 to vector<8x1xf32>
    %123 = arith.divf %121, %122 : vector<8x1xf32>
    %124 = vector.broadcast %123 : vector<8x1xf32> to vector<8x32xf32>
    %125 = arith.subf %119, %124 : vector<8x32xf32>
    %126 = arith.mulf %125, %125 : vector<8x32xf32>
    %cst_54 = arith.constant dense<0.000000e+00> : vector<8xf32>
    %127 = vector.multi_reduction <add>, %126, %cst_54 [1] : vector<8x32xf32> to vector<8xf32>
    %128 = vector.shape_cast %127 : vector<8xf32> to vector<8x1xf32>
    %cst_55 = arith.constant 3.200000e+01 : f32
    %129 = vector.broadcast %cst_55 : f32 to vector<8x1xf32>
    %130 = arith.divf %128, %129 : vector<8x1xf32>
    %131 = vector.broadcast %123 : vector<8x1xf32> to vector<8x32xf32>
    %132 = arith.subf %119, %131 : vector<8x32xf32>
    %cst_56 = arith.constant 9.99999996E-13 : f32
    %133 = vector.broadcast %cst_56 : f32 to vector<8x1xf32>
    %134 = arith.addf %130, %133 : vector<8x1xf32>
    %135 = math.rsqrt %134 : vector<8x1xf32>
    %136 = vector.broadcast %135 : vector<8x1xf32> to vector<8x32xf32>
    %137 = arith.mulf %132, %136 : vector<8x32xf32>
    %138 = vector.shape_cast %12 : vector<32xf32> to vector<1x32xf32>
    %139 = vector.broadcast %138 : vector<1x32xf32> to vector<8x32xf32>
    %140 = arith.mulf %137, %139 : vector<8x32xf32>
    %141 = vector.shape_cast %14 : vector<32xf32> to vector<1x32xf32>
    %142 = vector.broadcast %141 : vector<1x32xf32> to vector<8x32xf32>
    %143 = arith.addf %140, %142 : vector<8x32xf32>
    %c0_57 = arith.constant 0 : index
    %c0_58 = arith.constant 0 : index
    %c0_59 = arith.constant 0 : index
    %144 = vector.load %arg12[%c0_57, %c0_58, %c0_59] : memref<1x8x32xf32, #tpu.memory_space<vmem>>, vector<1x8x32xf32>
    %145 = vector.shape_cast %144 : vector<1x8x32xf32> to vector<8x32xf32>
    %146 = vector.shape_cast %143 : vector<8x32xf32> to vector<1x8x32xf32>
    tpu.vector_store %arg12[%c0_57, %c0_58, %c0_59], %146 {strides = array<i32>} : memref<1x8x32xf32, #tpu.memory_space<vmem>>, vector<1x8x32xf32>,
    return
  }
  func.func @transform_0(%arg0: i32) -> (i32, i32, i32) {
    %c0_i32 = arith.constant 0 : i32
    %c0_i32_0 = arith.constant 0 : i32
    %c0_i32_1 = arith.constant 0 : i32
    return %arg0, %c0_i32, %c0_i32_0 : i32, i32, i32
  }
  func.func @transform_1(%arg0: i32) -> (i32, i32) {
    %c0_i32 = arith.constant 0 : i32
    %c0_i32_0 = arith.constant 0 : i32
    %c0_i32_1 = arith.constant 0 : i32
    return %c0_i32, %c0_i32_0 : i32, i32
  }
  func.func @transform_2(%arg0: i32) -> (i32, i32) {
    %c0_i32 = arith.constant 0 : i32
    %c0_i32_0 = arith.constant 0 : i32
    %c0_i32_1 = arith.constant 0 : i32
    return %c0_i32, %c0_i32_0 : i32, i32
  }
  func.func @transform_3(%arg0: i32) -> (i32, i32) {
    %c0_i32 = arith.constant 0 : i32
    %c0_i32_0 = arith.constant 0 : i32
    %c0_i32_1 = arith.constant 0 : i32
    return %c0_i32, %c0_i32_0 : i32, i32
  }
  func.func @transform_4(%arg0: i32) -> (i32, i32) {
    %c0_i32 = arith.constant 0 : i32
    %c0_i32_0 = arith.constant 0 : i32
    %c0_i32_1 = arith.constant 0 : i32
    return %c0_i32, %c0_i32_0 : i32, i32
  }
  func.func @transform_5(%arg0: i32) -> (i32, i32) {
    %c0_i32 = arith.constant 0 : i32
    %c0_i32_0 = arith.constant 0 : i32
    %c0_i32_1 = arith.constant 0 : i32
    return %c0_i32, %c0_i32_0 : i32, i32
  }
  func.func @transform_6(%arg0: i32) -> (i32, i32) {
    %c0_i32 = arith.constant 0 : i32
    %c0_i32_0 = arith.constant 0 : i32
    %c0_i32_1 = arith.constant 0 : i32
    return %c0_i32, %c0_i32_0 : i32, i32
  }
  func.func @transform_7(%arg0: i32) -> (i32, i32) {
    %c0_i32 = arith.constant 0 : i32
    %c0_i32_0 = arith.constant 0 : i32
    %c0_i32_1 = arith.constant 0 : i32
    return %c0_i32, %c0_i32_0 : i32, i32
  }
  func.func @transform_8(%arg0: i32) -> (i32, i32) {
    %c0_i32 = arith.constant 0 : i32
    %c0_i32_0 = arith.constant 0 : i32
    %c0_i32_1 = arith.constant 0 : i32
    return %c0_i32, %c0_i32_0 : i32, i32
  }
  func.func @transform_9(%arg0: i32) -> (i32, i32) {
    %c0_i32 = arith.constant 0 : i32
    %c0_i32_0 = arith.constant 0 : i32
    %c0_i32_1 = arith.constant 0 : i32
    return %c0_i32, %c0_i32_0 : i32, i32
  }
  func.func @transform_10(%arg0: i32) -> (i32, i32) {
    %c0_i32 = arith.constant 0 : i32
    %c0_i32_0 = arith.constant 0 : i32
    %c0_i32_1 = arith.constant 0 : i32
    return %c0_i32, %c0_i32_0 : i32, i32
  }
  func.func @transform_11(%arg0: i32) -> (i32, i32, i32) {
    %c0_i32 = arith.constant 0 : i32
    %c0_i32_0 = arith.constant 0 : i32
    %c0_i32_1 = arith.constant 0 : i32
    return %arg0, %c0_i32, %c0_i32_0 : i32, i32, i32
  }
}

</mosaic_0001>

<llo_original>
// kernel: tpu_custom_call.1
$region0: #{tpu_custom_call.1}
  #allocation0 [shape = 'u32[]', space=smem, size = 0x4, offset = 0x4, fixed_abs, tag = 'smem constant byte address 0x4 - core index']
  #allocation1 [shape = 'u32[144,128]{1,0:T(1,128)}', space=vmem, size = 0x12000, scoped, tag = 'internal scratch']
  #allocation2 [shape = 'bf16[8,32]{1,0:T(8,128)(2,1)}', space=vmem, size = 0x800, scoped, tag = 'scratch operand']
  %s0 = inlined_call_operand.hbm [shape: f32[2,8,32], index: 0, kind: input, shape index: {}]
  %s1 = inlined_call_operand.hbm [shape: bf16[32,32], index: 1, kind: input, shape index: {}]
  %s2 = inlined_call_operand.vmem [shape: f32[1,32], index: 2, kind: input, shape index: {}]
  %s3 = inlined_call_operand.hbm [shape: bf16[32,32], index: 3, kind: input, shape index: {}]
  %s4 = inlined_call_operand.vmem [shape: f32[1,32], index: 4, kind: input, shape index: {}]
  %s5 = inlined_call_operand.hbm [shape: bf16[32,32], index: 5, kind: input, shape index: {}]
  %s6 = inlined_call_operand.vmem [shape: f32[1,32], index: 6, kind: input, shape index: {}]
  %s7 = inlined_call_operand.hbm [shape: bf16[32,32], index: 7, kind: input, shape index: {}]
  %s8 = inlined_call_operand.vmem [shape: f32[1,32], index: 8, kind: input, shape index: {}]
  %s9 = inlined_call_operand.vmem [shape: f32[1,32], index: 9, kind: input, shape index: {}]
  %s10 = inlined_call_operand.vmem [shape: f32[1,32], index: 10, kind: input, shape index: {}]
  %s11 = inlined_call_operand.hbm [shape: f32[2,8,32], index: 11, kind: output, shape index: {}]
  %s12 = sld [smem:[#allocation0]]
  $region97: #{tpu_custom_call.1} parent=0
    _
  %s14 = ssub.s32 1, %s12
  %s15 = scalar_select 0, %s14, %s12
  $region1: #{tpu_custom_call.1} parent=0
    #allocation3 [shape = 'u8[8192]{0}', space=vmem, size = 0x2000, scoped, tag = 'input window, operand 0']
    #allocation4 [shape = 's32[2]{0}', space=sflag, size = 0x8, scoped, tag = 'scoped memory for tpu_custom_call.1']
    #allocation5 [shape = 's32[2]{0}', space=sflag, size = 0x8, scoped, tag = 'scoped memory for tpu_custom_call.1']
    #allocation6 [shape = 'u8[8192]{0}', space=vmem, size = 0x2000, scoped, tag = 'input window, operand 1, single buffered']
    #allocation7 [shape = 's32[1]{0}', space=sflag, size = 0x4, scoped, tag = 'scoped memory for tpu_custom_call.1']
    #allocation8 [shape = 'u8[8192]{0}', space=vmem, size = 0x2000, scoped, tag = 'input window, operand 3, single buffered']
    #allocation9 [shape = 'u8[8192]{0}', space=vmem, size = 0x2000, scoped, tag = 'input window, operand 5, single buffered']
    #allocation10 [shape = 's32[1]{0}', space=sflag, size = 0x4, scoped, tag = 'scoped memory for tpu_custom_call.1']
    #allocation11 [shape = 'u8[8192]{0}', space=vmem, size = 0x2000, scoped, tag = 'input window, operand 7, single buffered']
    #allocation12 [shape = 'u8[8192]{0}', space=vmem, size = 0x2000, scoped, tag = 'output window, operand 0']
    %16 = vsyncpa [#allocation4], 0
    %s17 = scalar_lea.sflag [#allocation4], 1
    %18 = vsyncpa %s17, 0
    %19 = vsyncpa [#allocation7], 0
    %20 = vsyncpa [#allocation10], 0
    %21 = vsyncpa [#allocation5], 0
    %s22 = scalar_lea.sflag [#allocation5], 1
    %23 = vsyncpa %s22, 0
    loop: start=0, step=1, limit=4
    $region2: #{tpu_custom_call.1} parent=1 // loop_pre_header
      _
    $region3: #{tpu_custom_call.1} parent=1 // loop_header
      %s25 = sphi 0, %s29
      %p26 = scmp.ge.s32.totalorder %s25, 4
      %s35 = sphi 0, %s37
      %s38 = sphi 0, %s35
      %s39 = sphi 0, %s38
      %s55 = sphi 0, %s39
      %s59 = sphi 0, %s59
      %s61 = sphi 0, %s59
      %s62 = sphi 0, %s61
      %s76 = sphi 0, %s62
      %s80 = sphi 0, %s80
      %s82 = sphi 0, %s80
      %s83 = sphi 0, %s82
      %s97 = sphi 0, %s83
      %s101 = sphi 0, %s101
      %s103 = sphi 0, %s101
      %s104 = sphi 0, %s103
      %s118 = sphi 0, %s104
      %s122 = sphi 0, %s122
      %s124 = sphi 0, %s122
      %s125 = sphi 0, %s124
      %s139 = sphi 0, %s125
      %s143 = sphi 0, %s143
      %s145 = sphi 0, %s143
      %s146 = sphi 0, %s145
      %s160 = sphi 0, %s146
      %s164 = sphi 0, %s164
      %s166 = sphi 0, %s164
      %s167 = sphi 0, %s166
      %s181 = sphi 0, %s167
      %s185 = sphi 0, %s185
      %s187 = sphi 0, %s185
      %s188 = sphi 0, %s187
      %s202 = sphi 0, %s188
      %s206 = sphi 0, %s206
      %s208 = sphi 0, %s206
      %s209 = sphi 0, %s208
      %s223 = sphi 0, %s209
      %s227 = sphi 0, %s227
      %s229 = sphi 0, %s227
      %s230 = sphi 0, %s229
      %s244 = sphi 0, %s230
      %s248 = sphi 0, %s248
      %s250 = sphi 0, %s248
      %s251 = sphi 0, %s250
      %s265 = sphi 0, %s251
      %s271 = sphi 0, %s273
      %s274 = sphi 0, %s271
      %s275 = sphi 0, %s274
      %s291 = sphi 0, %s275
    $region4: #{tpu_custom_call.1} parent=1 // loop_header_branch
      %28 = sbr.rel (%p26) target = $region8
    $region5: #{tpu_custom_call.1} parent=1 // loop_body
      %s30 = ssub.s32 %s25, 1
      %s31 = ssub.s32 %s25, 2
      %s32 = sadd.s32 %s25, 1
      %s33 = ssub.s32 %s25, %s32
      %p34 = scmp.eq.s32.totalorder %s33, 0
      %s36 = sadd.s32 %s35, 1
      %s37 = scalar_select %p34, %s35, %s36
      %p40 = pneg %p34
      %p41 = scmp.eq.s32.totalorder %s25, 1
      %p42 = por %p40, %p41
      %p43 = scmp.ne.s32.totalorder %s35, %s38
      %p44 = scmp.eq.s32.totalorder %s25, 0
      %p45 = por %p43, %p44
      %p46 = scmp.ne.s32.totalorder %s35, %s38
      %p47 = scmp.eq.s32.totalorder %s30, 1
      %p48 = por %p46, %p47
      %p49 = scmp.ne.s32.totalorder %s38, %s39
      %p50 = scmp.eq.s32.totalorder %s30, 0
      %p51 = por %p49, %p50
      %p52 = scmp.ne.s32.totalorder %s38, %s39
      %p53 = scmp.eq.s32.totalorder %s31, 1
      %p54 = por %p52, %p53
      %p56 = scmp.ne.s32.totalorder %s39, %s55
      %p57 = scmp.eq.s32.totalorder %s31, 0
      %p58 = por %p56, %p57
      %s60 = sadd.s32 %s59, 1
      %p63 = scmp.eq.s32.totalorder %s25, 1
      %p64 = scmp.ne.s32.totalorder %s59, %s61
      %p65 = scmp.eq.s32.totalorder %s25, 0
      %p66 = por %p64, %p65
      %p67 = scmp.ne.s32.totalorder %s59, %s61
      %p68 = scmp.eq.s32.totalorder %s30, 1
      %p69 = por %p67, %p68
      %p70 = scmp.ne.s32.totalorder %s61, %s62
      %p71 = scmp.eq.s32.totalorder %s30, 0
      %p72 = por %p70, %p71
      %p73 = scmp.ne.s32.totalorder %s61, %s62
      %p74 = scmp.eq.s32.totalorder %s31, 1
      %p75 = por %p73, %p74
      %p77 = scmp.ne.s32.totalorder %s62, %s76
      %p78 = scmp.eq.s32.totalorder %s31, 0
      %p79 = por %p77, %p78
      %s81 = sadd.s32 %s80, 1
      %p84 = scmp.eq.s32.totalorder %s25, 1
      %p85 = scmp.ne.s32.totalorder %s80, %s82
      %p86 = scmp.eq.s32.totalorder %s25, 0
      %p87 = por %p85, %p86
      %p88 = scmp.ne.s32.totalorder %s80, %s82
      %p89 = scmp.eq.s32.totalorder %s30, 1
      %p90 = por %p88, %p89
      %p91 = scmp.ne.s32.totalorder %s82, %s83
      %p92 = scmp.eq.s32.totalorder %s30, 0
      %p93 = por %p91, %p92
      %p94 = scmp.ne.s32.totalorder %s82, %s83
      %p95 = scmp.eq.s32.totalorder %s31, 1
      %p96 = por %p94, %p95
      %p98 = scmp.ne.s32.totalorder %s83, %s97
      %p99 = scmp.eq.s32.totalorder %s31, 0
      %p100 = por %p98, %p99
      %s102 = sadd.s32 %s101, 1
      %p105 = scmp.eq.s32.totalorder %s25, 1
      %p106 = scmp.ne.s32.totalorder %s101, %s103
      %p107 = scmp.eq.s32.totalorder %s25, 0
      %p108 = por %p106, %p107
      %p109 = scmp.ne.s32.totalorder %s101, %s103
      %p110 = scmp.eq.s32.totalorder %s30, 1
      %p111 = por %p109, %p110
      %p112 = scmp.ne.s32.totalorder %s103, %s104
      %p113 = scmp.eq.s32.totalorder %s30, 0
      %p114 = por %p112, %p113
      %p115 = scmp.ne.s32.totalorder %s103, %s104
      %p116 = scmp.eq.s32.totalorder %s31, 1
      %p117 = por %p115, %p116
      %p119 = scmp.ne.s32.totalorder %s104, %s118
      %p120 = scmp.eq.s32.totalorder %s31, 0
      %p121 = por %p119, %p120
      %s123 = sadd.s32 %s122, 1
      %p126 = scmp.eq.s32.totalorder %s25, 1
      %p127 = scmp.ne.s32.totalorder %s122, %s124
      %p128 = scmp.eq.s32.totalorder %s25, 0
      %p129 = por %p127, %p128
      %p130 = scmp.ne.s32.totalorder %s122, %s124
      %p131 = scmp.eq.s32.totalorder %s30, 1
      %p132 = por %p130, %p131
      %p133 = scmp.ne.s32.totalorder %s124, %s125
      %p134 = scmp.eq.s32.totalorder %s30, 0
      %p135 = por %p133, %p134
      %p136 = scmp.ne.s32.totalorder %s124, %s125
      %p137 = scmp.eq.s32.totalorder %s31, 1
      %p138 = por %p136, %p137
      %p140 = scmp.ne.s32.totalorder %s125, %s139
      %p141 = scmp.eq.s32.totalorder %s31, 0
      %p142 = por %p140, %p141
      %s144 = sadd.s32 %s143, 1
      %p147 = scmp.eq.s32.totalorder %s25, 1
      %p148 = scmp.ne.s32.totalorder %s143, %s145
      %p149 = scmp.eq.s32.totalorder %s25, 0
      %p150 = por %p148, %p149
      %p151 = scmp.ne.s32.totalorder %s143, %s145
      %p152 = scmp.eq.s32.totalorder %s30, 1
      %p153 = por %p151, %p152
      %p154 = scmp.ne.s32.totalorder %s145, %s146
      %p155 = scmp.eq.s32.totalorder %s30, 0
      %p156 = por %p154, %p155
      %p157 = scmp.ne.s32.totalorder %s145, %s146
      %p158 = scmp.eq.s32.totalorder %s31, 1
      %p159 = por %p157, %p158
      %p161 = scmp.ne.s32.totalorder %s146, %s160
      %p162 = scmp.eq.s32.totalorder %s31, 0
      %p163 = por %p161, %p162
      %s165 = sadd.s32 %s164, 1
      %p168 = scmp.eq.s32.totalorder %s25, 1
      %p169 = scmp.ne.s32.totalorder %s164, %s166
      %p170 = scmp.eq.s32.totalorder %s25, 0
      %p171 = por %p169, %p170
      %p172 = scmp.ne.s32.totalorder %s164, %s166
      %p173 = scmp.eq.s32.totalorder %s30, 1
      %p174 = por %p172, %p173
      %p175 = scmp.ne.s32.totalorder %s166, %s167
      %p176 = scmp.eq.s32.totalorder %s30, 0
      %p177 = por %p175, %p176
      %p178 = scmp.ne.s32.totalorder %s166, %s167
      %p179 = scmp.eq.s32.totalorder %s31, 1
      %p180 = por %p178, %p179
      %p182 = scmp.ne.s32.totalorder %s167, %s181
      %p183 = scmp.eq.s32.totalorder %s31, 0
      %p184 = por %p182, %p183
      %s186 = sadd.s32 %s185, 1
      %p189 = scmp.eq.s32.totalorder %s25, 1
      %p190 = scmp.ne.s32.totalorder %s185, %s187
      %p191 = scmp.eq.s32.totalorder %s25, 0
      %p192 = por %p190, %p191
      %p193 = scmp.ne.s32.totalorder %s185, %s187
      %p194 = scmp.eq.s32.totalorder %s30, 1
      %p195 = por %p193, %p194
      %p196 = scmp.ne.s32.totalorder %s187, %s188
      %p197 = scmp.eq.s32.totalorder %s30, 0
      %p198 = por %p196, %p197
      %p199 = scmp.ne.s32.totalorder %s187, %s188
      %p200 = scmp.eq.s32.totalorder %s31, 1
      %p201 = por %p199, %p200
      %p203 = scmp.ne.s32.totalorder %s188, %s202
      %p204 = scmp.eq.s32.totalorder %s31, 0
      %p205 = por %p203, %p204
      %s207 = sadd.s32 %s206, 1
      %p210 = scmp.eq.s32.totalorder %s25, 1
      %p211 = scmp.ne.s32.totalorder %s206, %s208
      %p212 = scmp.eq.s32.totalorder %s25, 0
      %p213 = por %p211, %p212
      %p214 = scmp.ne.s32.totalorder %s206, %s208
      %p215 = scmp.eq.s32.totalorder %s30, 1
      %p216 = por %p214, %p215
      %p217 = scmp.ne.s32.totalorder %s208, %s209
      %p218 = scmp.eq.s32.totalorder %s30, 0
      %p219 = por %p217, %p218
      %p220 = scmp.ne.s32.totalorder %s208, %s209
      %p221 = scmp.eq.s32.totalorder %s31, 1
      %p222 = por %p220, %p221
      %p224 = scmp.ne.s32.totalorder %s209, %s223
      %p225 = scmp.eq.s32.totalorder %s31, 0
      %p226 = por %p224, %p225
      %s228 = sadd.s32 %s227, 1
      %p231 = scmp.eq.s32.totalorder %s25, 1
      %p232 = scmp.ne.s32.totalorder %s227, %s229
      %p233 = scmp.eq.s32.totalorder %s25, 0
      %p234 = por %p232, %p233
      %p235 = scmp.ne.s32.totalorder %s227, %s229
      %p236 = scmp.eq.s32.totalorder %s30, 1
      %p237 = por %p235, %p236
      %p238 = scmp.ne.s32.totalorder %s229, %s230
      %p239 = scmp.eq.s32.totalorder %s30, 0
      %p240 = por %p238, %p239
      %p241 = scmp.ne.s32.totalorder %s229, %s230
      %p242 = scmp.eq.s32.totalorder %s31, 1
      %p243 = por %p241, %p242
      %p245 = scmp.ne.s32.totalorder %s230, %s244
      %p246 = scmp.eq.s32.totalorder %s31, 0
      %p247 = por %p245, %p246
      %s249 = sadd.s32 %s248, 1
      %p252 = scmp.eq.s32.totalorder %s25, 1
      %p253 = scmp.ne.s32.totalorder %s248, %s250
      %p254 = scmp.eq.s32.totalorder %s25, 0
      %p255 = por %p253, %p254
      %p256 = scmp.ne.s32.totalorder %s248, %s250
      %p257 = scmp.eq.s32.totalorder %s30, 1
      %p258 = por %p256, %p257
      %p259 = scmp.ne.s32.totalorder %s250, %s251
      %p260 = scmp.eq.s32.totalorder %s30, 0
      %p261 = por %p259, %p260
      %p262 = scmp.ne.s32.totalorder %s250, %s251
      %p263 = scmp.eq.s32.totalorder %s31, 1
      %p264 = por %p262, %p263
      %p266 = scmp.ne.s32.totalorder %s251, %s265
      %p267 = scmp.eq.s32.totalorder %s31, 0
      %p268 = por %p266, %p267
      %s269 = ssub.s32 %s25, %s32
      %p270 = scmp.eq.s32.totalorder %s269, 0
      %s272 = sadd.s32 %s271, 1
      %s273 = scalar_select %p270, %s271, %s272
      %p276 = pneg %p270
      %p277 = scmp.eq.s32.totalorder %s25, 1
      %p278 = por %p276, %p277
      %p279 = scmp.ne.s32.totalorder %s271, %s274
      %p280 = scmp.eq.s32.totalorder %s25, 0
      %p281 = por %p279, %p280
      %p282 = scmp.ne.s32.totalorder %s271, %s274
      %p283 = scmp.eq.s32.totalorder %s30, 1
      %p284 = por %p282, %p283
      %p285 = scmp.ne.s32.totalorder %s274, %s275
      %p286 = scmp.eq.s32.totalorder %s30, 0
      %p287 = por %p285, %p286
      %p288 = scmp.ne.s32.totalorder %s274, %s275
      %p289 = scmp.eq.s32.totalorder %s31, 1
      %p290 = por %p288, %p289
      %p292 = scmp.ne.s32.totalorder %s275, %s291
      %p293 = scmp.eq.s32.totalorder %s31, 0
      %p294 = por %p292, %p293
      %p295 = scmp.le.s32.totalorder 1, %s25
      %p296 = scmp.lt.s32.totalorder %s25, 3
      %p297 = pnand %p295, %p296
      %p298 = pneg %p297
      // Predicated region
      $region9: #{tpu_custom_call.1} parent=5 // pred_check
        _
      $region10: #{tpu_custom_call.1} parent=5 // pred_check_branch
        %300 = sbr.rel (%p297) target = $region12
      $region11: #{tpu_custom_call.1} parent=5 // pred_region
        %s301 = ssub.s32 %s25, 1
        // Predicated region
        $region13: #{tpu_custom_call.1} parent=11 // pred_check
          %p302 = pneg %p72
        $region14: #{tpu_custom_call.1} parent=11 // pred_check_branch
          %304 = sbr.rel (%p302) target = $region16
        $region15: #{tpu_custom_call.1} parent=11 // pred_region
          %s306 = ssub.s32 256, 256
          %307 = vsyncadd [#allocation7], %s306
          %s308 = sshll.u32 [#allocation6], 4
          %s309 = int_to_ptr.vmem [resolvable:$true] %s308
          %314 = dma.hbm_to_vmem [thread:$0]  %s1, 256, %s309, [#allocation7], 64, 64, 4
        $region16: #{tpu_custom_call.1} parent=11 // pred_fallthru
          _
        // Predicated region
        $region17: #{tpu_custom_call.1} parent=11 // pred_check
          %p315 = pneg %p93
        $region18: #{tpu_custom_call.1} parent=11 // pred_check_branch
          %317 = sbr.rel (%p315) target = $region20
        $region19: #{tpu_custom_call.1} parent=11 // pred_region
          _
        $region20: #{tpu_custom_call.1} parent=11 // pred_fallthru
          _
        // Predicated region
        $region21: #{tpu_custom_call.1} parent=11 // pred_check
          %p318 = pneg %p114
        $region22: #{tpu_custom_call.1} parent=11 // pred_check_branch
          %320 = sbr.rel (%p318) target = $region24
        $region23: #{tpu_custom_call.1} parent=11 // pred_region
          %s322 = ssub.s32 256, 256
          %323 = vsyncadd [#allocation7], %s322
          %s324 = sshll.u32 [#allocation8], 4
          %s325 = int_to_ptr.vmem [resolvable:$true] %s324
          %330 = dma.hbm_to_vmem [thread:$0]  %s3, 256, %s325, [#allocation7], 64, 64, 4
        $region24: #{tpu_custom_call.1} parent=11 // pred_fallthru
          _
        // Predicated region
        $region25: #{tpu_custom_call.1} parent=11 // pred_check
          %p331 = pneg %p135
        $region26: #{tpu_custom_call.1} parent=11 // pred_check_branch
          %333 = sbr.rel (%p331) target = $region28
        $region27: #{tpu_custom_call.1} parent=11 // pred_region
          _
        $region28: #{tpu_custom_call.1} parent=11 // pred_fallthru
          _
        // Predicated region
        $region29: #{tpu_custom_call.1} parent=11 // pred_check
          %p334 = pneg %p156
        $region30: #{tpu_custom_call.1} parent=11 // pred_check_branch
          %336 = sbr.rel (%p334) target = $region32
        $region31: #{tpu_custom_call.1} parent=11 // pred_region
          %s338 = ssub.s32 256, 256
          %339 = vsyncadd [#allocation10], %s338
          %s340 = sshll.u32 [#allocation9], 4
          %s341 = int_to_ptr.vmem [resolvable:$true] %s340
          %346 = dma.hbm_to_vmem [thread:$0]  %s5, 256, %s341, [#allocation10], 64, 64, 4
        $region32: #{tpu_custom_call.1} parent=11 // pred_fallthru
          _
        // Predicated region
        $region33: #{tpu_custom_call.1} parent=11 // pred_check
          %p347 = pneg %p177
        $region34: #{tpu_custom_call.1} parent=11 // pred_check_branch
          %349 = sbr.rel (%p347) target = $region36
        $region35: #{tpu_custom_call.1} parent=11 // pred_region
          _
        $region36: #{tpu_custom_call.1} parent=11 // pred_fallthru
          _
        // Predicated region
        $region37: #{tpu_custom_call.1} parent=11 // pred_check
          %p350 = pneg %p198
        $region38: #{tpu_custom_call.1} parent=11 // pred_check_branch
          %352 = sbr.rel (%p350) target = $region40
        $region39: #{tpu_custom_call.1} parent=11 // pred_region
          %s354 = ssub.s32 256, 256
          %355 = vsyncadd [#allocation10], %s354
          %s356 = sshll.u32 [#allocation11], 4
          %s357 = int_to_ptr.vmem [resolvable:$true] %s356
          %362 = dma.hbm_to_vmem [thread:$0]  %s7, 256, %s357, [#allocation10], 64, 64, 4
        $region40: #{tpu_custom_call.1} parent=11 // pred_fallthru
          _
        // Predicated region
        $region41: #{tpu_custom_call.1} parent=11 // pred_check
          %p363 = pneg %p219
        $region42: #{tpu_custom_call.1} parent=11 // pred_check_branch
          %365 = sbr.rel (%p363) target = $region44
        $region43: #{tpu_custom_call.1} parent=11 // pred_region
          _
        $region44: #{tpu_custom_call.1} parent=11 // pred_fallthru
          _
        // Predicated region
        $region45: #{tpu_custom_call.1} parent=11 // pred_check
          %p366 = pneg %p240
        $region46: #{tpu_custom_call.1} parent=11 // pred_check_branch
          %368 = sbr.rel (%p366) target = $region48
        $region47: #{tpu_custom_call.1} parent=11 // pred_region
          _
        $region48: #{tpu_custom_call.1} parent=11 // pred_fallthru
          _
        // Predicated region
        $region49: #{tpu_custom_call.1} parent=11 // pred_check
          %p369 = pneg %p261
        $region50: #{tpu_custom_call.1} parent=11 // pred_check_branch
          %371 = sbr.rel (%p369) target = $region52
        $region51: #{tpu_custom_call.1} parent=11 // pred_region
          _
        $region52: #{tpu_custom_call.1} parent=11 // pred_fallthru
          _
      $region12: #{tpu_custom_call.1} parent=5 // pred_fallthru
        _
      %p372 = scmp.lt.s32.totalorder %s25, 2
      // Predicated region
      $region53: #{tpu_custom_call.1} parent=5 // pred_check
        %p373 = pneg %p372
      $region54: #{tpu_custom_call.1} parent=5 // pred_check_branch
        %375 = sbr.rel (%p373) target = $region56
      $region55: #{tpu_custom_call.1} parent=5 // pred_region
        // Predicated region
        $region57: #{tpu_custom_call.1} parent=55 // pred_check
          %p376 = pneg %p45
        $region58: #{tpu_custom_call.1} parent=55 // pred_check_branch
          %378 = sbr.rel (%p376) target = $region60
        $region59: #{tpu_custom_call.1} parent=55 // pred_region
          %s379 = sand.u32 %s35, 1
          %s380 = scalar_lea.sflag [#allocation4], %s379
          %s381 = sand.u32 %s35, 1
          %s382 = smul.addr %s381, 8
          %s383 = scalar_lea.vmem [#allocation3], %s382
          %s385 = ssub.s32 128, 128
          %386 = vsyncadd %s380, %s385
          %s387 = smul.addr %s25, 128
          %s388 = scalar_lea.hbm %s0, %s387
          %s390 = sshll.u32 %s383, 4
          %s391 = int_to_ptr.vmem [resolvable:$true] %s390
          %393 = dma.hbm_to_vmem [thread:$0]  %s388, 128, %s391, %s380
        $region60: #{tpu_custom_call.1} parent=55 // pred_fallthru
          _
      $region56: #{tpu_custom_call.1} parent=5 // pred_fallthru
        _
      %p394 = scmp.le.s32.totalorder 1, %s25
      %p395 = scmp.lt.s32.totalorder %s25, 3
      %p396 = pnand %p394, %p395
      %p397 = pneg %p396
      // Predicated region
      $region61: #{tpu_custom_call.1} parent=5 // pred_check
        _
      $region62: #{tpu_custom_call.1} parent=5 // pred_check_branch
        %399 = sbr.rel (%p396) target = $region64
      $region63: #{tpu_custom_call.1} parent=5 // pred_region
        %s400 = ssub.s32 %s25, 1
        %s401 = sand.u32 %s38, 1
        %s402 = scalar_lea.sflag [#allocation4], %s401
        %s403 = sand.u32 %s38, 1
        %s404 = smul.addr %s403, 8
        %s405 = scalar_lea.vmem [#allocation3], %s404
        // Predicated region
        $region65: #{tpu_custom_call.1} parent=63 // pred_check
          %p406 = pneg %p51
        $region66: #{tpu_custom_call.1} parent=63 // pred_check_branch
          %408 = sbr.rel (%p406) target = $region68
        $region67: #{tpu_custom_call.1} parent=63 // pred_region
          %409 = dma.done %s402, 128
        $region68: #{tpu_custom_call.1} parent=63 // pred_fallthru
          _
        // Predicated region
        $region69: #{tpu_custom_call.1} parent=63 // pred_check
          %p410 = pneg %p72
        $region70: #{tpu_custom_call.1} parent=63 // pred_check_branch
          %412 = sbr.rel (%p410) target = $region72
        $region71: #{tpu_custom_call.1} parent=63 // pred_region
          %413 = dma.done [#allocation7], 256
        $region72: #{tpu_custom_call.1} parent=63 // pred_fallthru
          _
        // Predicated region
        $region73: #{tpu_custom_call.1} parent=63 // pred_check
          %p414 = pneg %p114
        $region74: #{tpu_custom_call.1} parent=63 // pred_check_branch
          %416 = sbr.rel (%p414) target = $region76
        $region75: #{tpu_custom_call.1} parent=63 // pred_region
          %417 = dma.done [#allocation7], 256
        $region76: #{tpu_custom_call.1} parent=63 // pred_fallthru
          _
        // Predicated region
        $region77: #{tpu_custom_call.1} parent=63 // pred_check
          %p418 = pneg %p156
        $region78: #{tpu_custom_call.1} parent=63 // pred_check_branch
          %420 = sbr.rel (%p418) target = $region80
        $region79: #{tpu_custom_call.1} parent=63 // pred_region
          %421 = dma.done [#allocation10], 256
        $region80: #{tpu_custom_call.1} parent=63 // pred_fallthru
          _
        // Predicated region
        $region81: #{tpu_custom_call.1} parent=63 // pred_check
          %p422 = pneg %p198
        $region82: #{tpu_custom_call.1} parent=63 // pred_check_branch
          %424 = sbr.rel (%p422) target = $region84
        $region83: #{tpu_custom_call.1} parent=63 // pred_region
          %425 = dma.done [#allocation10], 256
        $region84: #{tpu_custom_call.1} parent=63 // pred_fallthru
          _
        %s426 = sand.u32 %s38, 1
        %s427 = scalar_lea.sflag [#allocation4], %s426
        %s428 = sand.u32 %s38, 1
        %s429 = smul.addr %s428, 8
        %s430 = scalar_lea.vmem [#allocation3], %s429
        %p431 = pneg %p51
        %p432 = pneg %p48
        %p433 = pneg %p72
        %p434 = pneg %p69
        %p435 = pneg %p93
        %p436 = pneg %p90
        %p437 = pneg %p114
        %p438 = pneg %p111
        %p439 = pneg %p135
        %p440 = pneg %p132
        %p441 = pneg %p156
        %p442 = pneg %p153
        %p443 = pneg %p177
        %p444 = pneg %p174
        %p445 = pneg %p198
        %p446 = pneg %p195
        %p447 = pneg %p219
        %p448 = pneg %p216
        %p449 = pneg %p240
        %p450 = pneg %p237
        %p451 = pneg %p261
        %p452 = pneg %p258
        %p453 = pneg %p287
        %p454 = pneg %p284
        %s455 = sand.u32 %s274, 1
        %s456 = scalar_lea.sflag [#allocation5], %s455
        %s457 = sand.u32 %s274, 1
        %s458 = smul.addr %s457, 8
        %s459 = scalar_lea.vmem [#allocation12], %s458
        %v461 = vld [vmem:[%s405] sm:$0xff]
        %v462 = vpack.c.bf16 %v461, %v461
        %v463 = vld [vmem:[%s2] sm:$0x1]
        %v464 = vld [vmem:[%s4] sm:$0x1]
        %v465 = vld [vmem:[%s6] sm:$0x1]
        %v466 = vld [vmem:[%s8] sm:$0x1]
        %v467 = vld [vmem:[%s9] sm:$0x1]
        %v468 = vld [vmem:[%s10] sm:$0x1]
        %v469 = vld [vmem:[#allocation6] sm:$0xf]
        %v470 = vld [vmem:[#allocation6 + $0x4] sm:$0xf]
        %v471 = vld [vmem:[#allocation6 + $0x8] sm:$0xf]
        %v472 = vld [vmem:[#allocation6 + $0xc] sm:$0xf]
        %v474 = vlaneseq
        %v475 = vshrl.u32 %v474, 7
        %v476 = vsub.s32 0, %v475
        %v477 = vrot.slane %v463, %v476
        %v483 = vunpack.c.l.b16 %v469
        %v484 = vunpack.c.l.b16 %v470
        %v485 = vunpack.c.l.b16 %v471
        %v486 = vunpack.c.l.b16 %v472
        %v487 = vpack.c.b16 %v484, %v483
        %v488 = vpack.c.b16 %v486, %v485
        %vm491 = vcmask 261120
        %v493 = vsel %vm491, %v462, 0
        %495 = vmatprep.subr.bf16.mxu0 0
        %496 = vmatpush1.bf16.msra.mxu0 0
        %497 = vmatprep.subr.bf16.mxu0 0
        %498 = vmatpush1.bf16.msra.mxu0 0
        %499 = vmatprep.subr.bf16.mxu0 0
        %500 = vmatpush1.bf16.msra.mxu0 0
        %501 = vmatprep.subr.bf16.mxu0 0
        %502 = vmatpush1.bf16.msra.mxu0 0
        %503 = vmatprep.subr.bf16.mxu0 0
        %504 = vmatpush1.bf16.msra.mxu0 0
        %505 = vmatprep.subr.bf16.mxu0 0
        %506 = vmatpush1.bf16.msra.mxu0 0
        %507 = vmatprep.subr.bf16.mxu0 0
        %508 = vmatpush1.bf16.msra.mxu0 %v488
        %509 = vmatprep.subr.bf16.mxu0 0
        %510 = vmatpush1.bf16.msra.mxu0 %v487
        %511 = vmatprep.subr.bf16.mxu0 0
        %512 = vmatpush2.bf16.msra.mxu0 0
        %513 = vmatprep.subr.bf16.mxu0 0
        %514 = vmatpush2.bf16.msra.mxu0 0
        %515 = vmatprep.subr.bf16.mxu0 0
        %516 = vmatpush2.bf16.msra.mxu0 0
        %517 = vmatprep.subr.bf16.mxu0 0
        %518 = vmatpush2.bf16.msra.mxu0 0
        %519 = vmatprep.subr.bf16.mxu0 0
        %520 = vmatpush2.bf16.msra.mxu0 0
        %521 = vmatprep.subr.bf16.mxu0 0
        %522 = vmatpush2.bf16.msra.mxu0 0
        %523 = vmatprep.subr.bf16.mxu0 0
        %524 = vmatpush2.bf16.msra.mxu0 0
        %525 = vmatprep.subr.bf16.mxu0 0
        %526 = vmatpush2.bf16.msra.mxu0 0
        %527 = vmatprep.mubr.bf16.mxu0 0
        %528 = vmatmul.mubr.bf16.gmra.mxu0 %v493
        %v529 = vpop.f32.mrf.mxu0
        %v530 = vadd.f32 %v477, %v529
        %v531 = vpop.f32.mrf.mxu0
        %v532 = vpop.f32.mrf.mxu0
        %v533 = vpop.f32.mrf.mxu0
        %534 = vdwg.mxu0
        %v535 = vpack.c.bf16 %v530, %v530
        %v536 = vld [vmem:[#allocation8] sm:$0xf]
        %v537 = vld [vmem:[#allocation8 + $0x4] sm:$0xf]
        %v538 = vld [vmem:[#allocation8 + $0x8] sm:$0xf]
        %v539 = vld [vmem:[#allocation8 + $0xc] sm:$0xf]
        %v541 = vlaneseq
        %v542 = vshrl.u32 %v541, 7
        %v543 = vsub.s32 0, %v542
        %v544 = vrot.slane %v464, %v543
        %v550 = vunpack.c.l.b16 %v536
        %v551 = vunpack.c.l.b16 %v537
        %v552 = vunpack.c.l.b16 %v538
        %v553 = vunpack.c.l.b16 %v539
        %v554 = vpack.c.b16 %v551, %v550
        %v555 = vpack.c.b16 %v553, %v552
        %558 = vmatprep.subr.bf16.mxu0 0
        %559 = vmatpush1.bf16.msra.mxu0 0
        %560 = vmatprep.subr.bf16.mxu0 0
        %561 = vmatpush1.bf16.msra.mxu0 0
        %562 = vmatprep.subr.bf16.mxu0 0
        %563 = vmatpush1.bf16.msra.mxu0 0
        %564 = vmatprep.subr.bf16.mxu0 0
        %565 = vmatpush1.bf16.msra.mxu0 0
        %566 = vmatprep.subr.bf16.mxu0 0
        %567 = vmatpush1.bf16.msra.mxu0 0
        %568 = vmatprep.subr.bf16.mxu0 0
        %569 = vmatpush1.bf16.msra.mxu0 0
        %570 = vmatprep.subr.bf16.mxu0 0
        %571 = vmatpush1.bf16.msra.mxu0 %v555
        %572 = vmatprep.subr.bf16.mxu0 0
        %573 = vmatpush1.bf16.msra.mxu0 %v554
        %574 = vmatprep.subr.bf16.mxu0 0
        %575 = vmatpush2.bf16.msra.mxu0 0
        %576 = vmatprep.subr.bf16.mxu0 0
        %577 = vmatpush2.bf16.msra.mxu0 0
        %578 = vmatprep.subr.bf16.mxu0 0
        %579 = vmatpush2.bf16.msra.mxu0 0
        %580 = vmatprep.subr.bf16.mxu0 0
        %581 = vmatpush2.bf16.msra.mxu0 0
        %582 = vmatprep.subr.bf16.mxu0 0
        %583 = vmatpush2.bf16.msra.mxu0 0
        %584 = vmatprep.subr.bf16.mxu0 0
        %585 = vmatpush2.bf16.msra.mxu0 0
        %586 = vmatprep.subr.bf16.mxu0 0
        %587 = vmatpush2.bf16.msra.mxu0 0
        %588 = vmatprep.subr.bf16.mxu0 0
        %589 = vmatpush2.bf16.msra.mxu0 0
        %590 = vmatprep.mubr.bf16.mxu0 0
        %591 = vmatmul.mubr.bf16.gmra.mxu0 %v493
        %v592 = vpop.f32.mrf.mxu0
        %v593 = vadd.f32 %v544, %v592
        %v594 = vpop.f32.mrf.mxu0
        %v595 = vpop.f32.mrf.mxu0
        %v596 = vpop.f32.mrf.mxu0
        %597 = vdwg.mxu0
        %v598 = vpack.c.bf16 %v593, %v593
        %v599 = vld [vmem:[#allocation9] sm:$0xf]
        %v600 = vld [vmem:[#allocation9 + $0x4] sm:$0xf]
        %v601 = vld [vmem:[#allocation9 + $0x8] sm:$0xf]
        %v602 = vld [vmem:[#allocation9 + $0xc] sm:$0xf]
        %v604 = vlaneseq
        %v605 = vshrl.u32 %v604, 7
        %v606 = vsub.s32 0, %v605
        %v607 = vrot.slane %v465, %v606
        %v613 = vunpack.c.l.b16 %v599
        %v614 = vunpack.c.l.b16 %v600
        %v615 = vunpack.c.l.b16 %v601
        %v616 = vunpack.c.l.b16 %v602
        %v617 = vpack.c.b16 %v614, %v613
        %v618 = vpack.c.b16 %v616, %v615
        %621 = vmatprep.subr.bf16.mxu0 0
        %622 = vmatpush1.bf16.msra.mxu0 0
        %623 = vmatprep.subr.bf16.mxu0 0
        %624 = vmatpush1.bf16.msra.mxu0 0
        %625 = vmatprep.subr.bf16.mxu0 0
        %626 = vmatpush1.bf16.msra.mxu0 0
        %627 = vmatprep.subr.bf16.mxu0 0
        %628 = vmatpush1.bf16.msra.mxu0 0
        %629 = vmatprep.subr.bf16.mxu0 0
        %630 = vmatpush1.bf16.msra.mxu0 0
        %631 = vmatprep.subr.bf16.mxu0 0
        %632 = vmatpush1.bf16.msra.mxu0 0
        %633 = vmatprep.subr.bf16.mxu0 0
        %634 = vmatpush1.bf16.msra.mxu0 %v618
        %635 = vmatprep.subr.bf16.mxu0 0
        %636 = vmatpush1.bf16.msra.mxu0 %v617
        %637 = vmatprep.subr.bf16.mxu0 0
        %638 = vmatpush2.bf16.msra.mxu0 0
        %639 = vmatprep.subr.bf16.mxu0 0
        %640 = vmatpush2.bf16.msra.mxu0 0
        %641 = vmatprep.subr.bf16.mxu0 0
        %642 = vmatpush2.bf16.msra.mxu0 0
        %643 = vmatprep.subr.bf16.mxu0 0
        %644 = vmatpush2.bf16.msra.mxu0 0
        %645 = vmatprep.subr.bf16.mxu0 0
        %646 = vmatpush2.bf16.msra.mxu0 0
        %647 = vmatprep.subr.bf16.mxu0 0
        %648 = vmatpush2.bf16.msra.mxu0 0
        %649 = vmatprep.subr.bf16.mxu0 0
        %650 = vmatpush2.bf16.msra.mxu0 0
        %651 = vmatprep.subr.bf16.mxu0 0
        %652 = vmatpush2.bf16.msra.mxu0 0
        %653 = vmatprep.mubr.bf16.mxu0 0
        %654 = vmatmul.mubr.bf16.gmra.mxu0 %v493
        %v655 = vpop.f32.mrf.mxu0
        %v656 = vadd.f32 %v607, %v655
        %v657 = vpop.f32.mrf.mxu0
        %v658 = vpop.f32.mrf.mxu0
        %v659 = vpop.f32.mrf.mxu0
        %660 = vdwg.mxu0
        %v661 = vpack.c.bf16 %v656, %v656
        %vm662 = vcmask 64512
        %v664 = vsel %vm662, %v535, 0
        %v667 = vsel %vm662, %v598, 0
        %669 = vmatprep.subr.bf16.mxu0 0
        %670 = vmatpush1.bf16.xpose.msra.mxu0 0
        %671 = vmatprep.subr.bf16.mxu0 0
        %672 = vmatpush1.bf16.xpose.msra.mxu0 0
        %673 = vmatprep.subr.bf16.mxu0 0
        %674 = vmatpush1.bf16.xpose.msra.mxu0 0
        %675 = vmatprep.subr.bf16.mxu0 0
        %676 = vmatpush1.bf16.xpose.msra.mxu0 0
        %677 = vmatprep.subr.bf16.mxu0 0
        %678 = vmatpush1.bf16.xpose.msra.mxu0 0
        %679 = vmatprep.subr.bf16.mxu0 0
        %680 = vmatpush1.bf16.xpose.msra.mxu0 0
        %681 = vmatprep.subr.bf16.mxu0 0
        %682 = vmatpush1.bf16.xpose.msra.mxu0 0
        %683 = vmatprep.subr.bf16.mxu0 0
        %684 = vmatpush1.bf16.xpose.msra.mxu0 %v667
        %685 = vmatprep.subr.bf16.mxu0 0
        %686 = vmatpush2.bf16.xpose.msra.mxu0 0
        %687 = vmatprep.subr.bf16.mxu0 0
        %688 = vmatpush2.bf16.xpose.msra.mxu0 0
        %689 = vmatprep.subr.bf16.mxu0 0
        %690 = vmatpush2.bf16.xpose.msra.mxu0 0
        %691 = vmatprep.subr.bf16.mxu0 0
        %692 = vmatpush2.bf16.xpose.msra.mxu0 0
        %693 = vmatprep.subr.bf16.mxu0 0
        %694 = vmatpush2.bf16.xpose.msra.mxu0 0
        %695 = vmatprep.subr.bf16.mxu0 0
        %696 = vmatpush2.bf16.xpose.msra.mxu0 0
        %697 = vmatprep.subr.bf16.mxu0 0
        %698 = vmatpush2.bf16.xpose.msra.mxu0 0
        %699 = vmatprep.subr.bf16.mxu0 0
        %700 = vmatpush2.bf16.xpose.msra.mxu0 0
        %701 = vmatprep.mubr.bf16.mxu0 0
        %702 = vmatmul.mubr.bf16.gmra.mxu0 %v664
        %v703 = vpop.f32.mrf.mxu0
        %v704 = vadd.f32 0.0, %v703
        %v705 = vpop.f32.mrf.mxu0
        %v706 = vpop.f32.mrf.mxu0
        %v707 = vpop.f32.mrf.mxu0
        %708 = vdwg.mxu0
        %v709 = vmul.f32 %v704, 0.35355338
        %v710 = vsel %vm662, %v709, -inf
        %711 = vmax.xlane.f32.xlu0 %v710
        %v712 = vpop.xlane.xlu0 %711
        %v713 = vsub.f32 %v709, %v712
        %v714 = vmul.f32 %v713, 1.442695
        %v715 = vpow.pop %v714
        %v716 = vsel %vm662, %v715, 0.0
        %717 = vadd.xlane.f32.xlu0 %v716
        %v718 = vpop.xlane.xlu0 %717
        %v719 = vrcp.pop %v718
        %v720 = vmul.f32 %v715, %v719
        %v721 = vpack.c.bf16 %v720, %v720
        %v723 = vsel %vm662, %v721, 0
        %vm725 = vcmask 1043456
        %v727 = vsel %vm725, %v661, 0
        %729 = vmatprep.subr.bf16.mxu0 0
        %730 = vmatpush1.bf16.msra.mxu0 0
        %731 = vmatprep.subr.bf16.mxu0 0
        %732 = vmatpush1.bf16.msra.mxu0 0
        %733 = vmatprep.subr.bf16.mxu0 0
        %734 = vmatpush1.bf16.msra.mxu0 0
        %735 = vmatprep.subr.bf16.mxu0 0
        %736 = vmatpush1.bf16.msra.mxu0 0
        %737 = vmatprep.subr.bf16.mxu0 0
        %738 = vmatpush1.bf16.msra.mxu0 0
        %739 = vmatprep.subr.bf16.mxu0 0
        %740 = vmatpush1.bf16.msra.mxu0 0
        %741 = vmatprep.subr.bf16.mxu0 0
        %742 = vmatpush1.bf16.msra.mxu0 0
        %743 = vmatprep.subr.bf16.mxu0 0
        %744 = vmatpush1.bf16.msra.mxu0 %v727
        %745 = vmatprep.subr.bf16.mxu0 0
        %746 = vmatpush2.bf16.msra.mxu0 0
        %747 = vmatprep.subr.bf16.mxu0 0
        %748 = vmatpush2.bf16.msra.mxu0 0
        %749 = vmatprep.subr.bf16.mxu0 0
        %750 = vmatpush2.bf16.msra.mxu0 0
        %751 = vmatprep.subr.bf16.mxu0 0
        %752 = vmatpush2.bf16.msra.mxu0 0
        %753 = vmatprep.subr.bf16.mxu0 0
        %754 = vmatpush2.bf16.msra.mxu0 0
        %755 = vmatprep.subr.bf16.mxu0 0
        %756 = vmatpush2.bf16.msra.mxu0 0
        %757 = vmatprep.subr.bf16.mxu0 0
        %758 = vmatpush2.bf16.msra.mxu0 0
        %759 = vmatprep.subr.bf16.mxu0 0
        %760 = vmatpush2.bf16.msra.mxu0 0
        %761 = vmatprep.mubr.bf16.mxu0 0
        %762 = vmatmul.mubr.bf16.gmra.mxu0 %v723
        %v763 = vpop.f32.mrf.mxu0
        %v764 = vadd.f32 0.0, %v763
        %v765 = vpop.f32.mrf.mxu0
        %v766 = vpop.f32.mrf.mxu0
        %v767 = vpop.f32.mrf.mxu0
        %768 = vdwg.mxu0
        %v769 = vpack.c.bf16 %v764, %v764
        %vm770 = vcmask 60416
        %771 = vst.msk [vmem:[#allocation2] sm:$0xf] %vm770, %v769
        %773 = vrot.lane.b32.xlu0 %v535, 120
        %v774 = vpop.permute.xlu0 %773
        %776 = vrot.lane.b32.xlu0 %v598, 120
        %v777 = vpop.permute.xlu0 %776
        %v779 = vsel %vm662, %v774, 0
        %v782 = vsel %vm662, %v777, 0
        %784 = vmatprep.subr.bf16.mxu0 0
        %785 = vmatpush1.bf16.xpose.msra.mxu0 0
        %786 = vmatprep.subr.bf16.mxu0 0
        %787 = vmatpush1.bf16.xpose.msra.mxu0 0
        %788 = vmatprep.subr.bf16.mxu0 0
        %789 = vmatpush1.bf16.xpose.msra.mxu0 0
        %790 = vmatprep.subr.bf16.mxu0 0
        %791 = vmatpush1.bf16.xpose.msra.mxu0 0
        %792 = vmatprep.subr.bf16.mxu0 0
        %793 = vmatpush1.bf16.xpose.msra.mxu0 0
        %794 = vmatprep.subr.bf16.mxu0 0
        %795 = vmatpush1.bf16.xpose.msra.mxu0 0
        %796 = vmatprep.subr.bf16.mxu0 0
        %797 = vmatpush1.bf16.xpose.msra.mxu0 0
        %798 = vmatprep.subr.bf16.mxu0 0
        %799 = vmatpush1.bf16.xpose.msra.mxu0 %v782
        %800 = vmatprep.subr.bf16.mxu0 0
        %801 = vmatpush2.bf16.xpose.msra.mxu0 0
        %802 = vmatprep.subr.bf16.mxu0 0
        %803 = vmatpush2.bf16.xpose.msra.mxu0 0
        %804 = vmatprep.subr.bf16.mxu0 0
        %805 = vmatpush2.bf16.xpose.msra.mxu0 0
        %806 = vmatprep.subr.bf16.mxu0 0
        %807 = vmatpush2.bf16.xpose.msra.mxu0 0
        %808 = vmatprep.subr.bf16.mxu0 0
        %809 = vmatpush2.bf16.xpose.msra.mxu0 0
        %810 = vmatprep.subr.bf16.mxu0 0
        %811 = vmatpush2.bf16.xpose.msra.mxu0 0
        %812 = vmatprep.subr.bf16.mxu0 0
        %813 = vmatpush2.bf16.xpose.msra.mxu0 0
        %814 = vmatprep.subr.bf16.mxu0 0
        %815 = vmatpush2.bf16.xpose.msra.mxu0 0
        %816 = vmatprep.mubr.bf16.mxu0 0
        %817 = vmatmul.mubr.bf16.gmra.mxu0 %v779
        %v818 = vpop.f32.mrf.mxu0
        %v819 = vadd.f32 0.0, %v818
        %v820 = vpop.f32.mrf.mxu0
        %v821 = vpop.f32.mrf.mxu0
        %v822 = vpop.f32.mrf.mxu0
        %823 = vdwg.mxu0
        %v824 = vmul.f32 %v819, 0.35355338
        %v825 = vsel %vm662, %v824, -inf
        %826 = vmax.xlane.f32.xlu0 %v825
        %v827 = vpop.xlane.xlu0 %826
        %v828 = vsub.f32 %v824, %v827
        %v829 = vmul.f32 %v828, 1.442695
        %v830 = vpow.pop %v829
        %v831 = vsel %vm662, %v830, 0.0
        %832 = vadd.xlane.f32.xlu0 %v831
        %v833 = vpop.xlane.xlu0 %832
        %v834 = vrcp.pop %v833
        %v835 = vmul.f32 %v830, %v834
        %v836 = vpack.c.bf16 %v835, %v835
        %838 = vrot.lane.b32.xlu0 %v661, 120
        %v839 = vpop.permute.xlu0 %838
        %v841 = vsel %vm662, %v836, 0
        %v844 = vsel %vm725, %v839, 0
        %846 = vmatprep.subr.bf16.mxu0 0
        %847 = vmatpush1.bf16.msra.mxu0 0
        %848 = vmatprep.subr.bf16.mxu0 0
        %849 = vmatpush1.bf16.msra.mxu0 0
        %850 = vmatprep.subr.bf16.mxu0 0
        %851 = vmatpush1.bf16.msra.mxu0 0
        %852 = vmatprep.subr.bf16.mxu0 0
        %853 = vmatpush1.bf16.msra.mxu0 0
        %854 = vmatprep.subr.bf16.mxu0 0
        %855 = vmatpush1.bf16.msra.mxu0 0
        %856 = vmatprep.subr.bf16.mxu0 0
        %857 = vmatpush1.bf16.msra.mxu0 0
        %858 = vmatprep.subr.bf16.mxu0 0
        %859 = vmatpush1.bf16.msra.mxu0 0
        %860 = vmatprep.subr.bf16.mxu0 0
        %861 = vmatpush1.bf16.msra.mxu0 %v844
        %862 = vmatprep.subr.bf16.mxu0 0
        %863 = vmatpush2.bf16.msra.mxu0 0
        %864 = vmatprep.subr.bf16.mxu0 0
        %865 = vmatpush2.bf16.msra.mxu0 0
        %866 = vmatprep.subr.bf16.mxu0 0
        %867 = vmatpush2.bf16.msra.mxu0 0
        %868 = vmatprep.subr.bf16.mxu0 0
        %869 = vmatpush2.bf16.msra.mxu0 0
        %870 = vmatprep.subr.bf16.mxu0 0
        %871 = vmatpush2.bf16.msra.mxu0 0
        %872 = vmatprep.subr.bf16.mxu0 0
        %873 = vmatpush2.bf16.msra.mxu0 0
        %874 = vmatprep.subr.bf16.mxu0 0
        %875 = vmatpush2.bf16.msra.mxu0 0
        %876 = vmatprep.subr.bf16.mxu0 0
        %877 = vmatpush2.bf16.msra.mxu0 0
        %878 = vmatprep.mubr.bf16.mxu0 0
        %879 = vmatmul.mubr.bf16.gmra.mxu0 %v841
        %v880 = vpop.f32.mrf.mxu0
        %v881 = vadd.f32 0.0, %v880
        %v882 = vpop.f32.mrf.mxu0
        %v883 = vpop.f32.mrf.mxu0
        %v884 = vpop.f32.mrf.mxu0
        %885 = vdwg.mxu0
        %v886 = vpack.c.bf16 %v881, %v881
        %v888 = vunpack.c.l.b16 %v886
        %v889 = vpack.c.b16 %v888, %v888
        %890 = vrot.lane.b32.xlu0 %v889, 8
        %v891 = vpop.permute.xlu0 %890
        %vm893 = vcmask 126016
        %894 = vst.msk [vmem:[#allocation2] sm:$0xf] %vm893, %v891
        %895 = vrot.lane.b32.xlu0 %v535, 112
        %v896 = vpop.permute.xlu0 %895
        %897 = vrot.lane.b32.xlu0 %v598, 112
        %v898 = vpop.permute.xlu0 %897
        %v900 = vsel %vm662, %v896, 0
        %v903 = vsel %vm662, %v898, 0
        %905 = vmatprep.subr.bf16.mxu0 0
        %906 = vmatpush1.bf16.xpose.msra.mxu0 0
        %907 = vmatprep.subr.bf16.mxu0 0
        %908 = vmatpush1.bf16.xpose.msra.mxu0 0
        %909 = vmatprep.subr.bf16.mxu0 0
        %910 = vmatpush1.bf16.xpose.msra.mxu0 0
        %911 = vmatprep.subr.bf16.mxu0 0
        %912 = vmatpush1.bf16.xpose.msra.mxu0 0
        %913 = vmatprep.subr.bf16.mxu0 0
        %914 = vmatpush1.bf16.xpose.msra.mxu0 0
        %915 = vmatprep.subr.bf16.mxu0 0
        %916 = vmatpush1.bf16.xpose.msra.mxu0 0
        %917 = vmatprep.subr.bf16.mxu0 0
        %918 = vmatpush1.bf16.xpose.msra.mxu0 0
        %919 = vmatprep.subr.bf16.mxu0 0
        %920 = vmatpush1.bf16.xpose.msra.mxu0 %v903
        %921 = vmatprep.subr.bf16.mxu0 0
        %922 = vmatpush2.bf16.xpose.msra.mxu0 0
        %923 = vmatprep.subr.bf16.mxu0 0
        %924 = vmatpush2.bf16.xpose.msra.mxu0 0
        %925 = vmatprep.subr.bf16.mxu0 0
        %926 = vmatpush2.bf16.xpose.msra.mxu0 0
        %927 = vmatprep.subr.bf16.mxu0 0
        %928 = vmatpush2.bf16.xpose.msra.mxu0 0
        %929 = vmatprep.subr.bf16.mxu0 0
        %930 = vmatpush2.bf16.xpose.msra.mxu0 0
        %931 = vmatprep.subr.bf16.mxu0 0
        %932 = vmatpush2.bf16.xpose.msra.mxu0 0
        %933 = vmatprep.subr.bf16.mxu0 0
        %934 = vmatpush2.bf16.xpose.msra.mxu0 0
        %935 = vmatprep.subr.bf16.mxu0 0
        %936 = vmatpush2.bf16.xpose.msra.mxu0 0
        %937 = vmatprep.mubr.bf16.mxu0 0
        %938 = vmatmul.mubr.bf16.gmra.mxu0 %v900
        %v939 = vpop.f32.mrf.mxu0
        %v940 = vadd.f32 0.0, %v939
        %v941 = vpop.f32.mrf.mxu0
        %v942 = vpop.f32.mrf.mxu0
        %v943 = vpop.f32.mrf.mxu0
        %944 = vdwg.mxu0
        %v945 = vmul.f32 %v940, 0.35355338
        %v946 = vsel %vm662, %v945, -inf
        %947 = vmax.xlane.f32.xlu0 %v946
        %v948 = vpop.xlane.xlu0 %947
        %v949 = vsub.f32 %v945, %v948
        %v950 = vmul.f32 %v949, 1.442695
        %v951 = vpow.pop %v950
        %v952 = vsel %vm662, %v951, 0.0
        %953 = vadd.xlane.f32.xlu0 %v952
        %v954 = vpop.xlane.xlu0 %953
        %v955 = vrcp.pop %v954
        %v956 = vmul.f32 %v951, %v955
        %v957 = vpack.c.bf16 %v956, %v956
        %958 = vrot.lane.b32.xlu0 %v661, 112
        %v959 = vpop.permute.xlu0 %958
        %v961 = vsel %vm662, %v957, 0
        %v964 = vsel %vm725, %v959, 0
        %966 = vmatprep.subr.bf16.mxu0 0
        %967 = vmatpush1.bf16.msra.mxu0 0
        %968 = vmatprep.subr.bf16.mxu0 0
        %969 = vmatpush1.bf16.msra.mxu0 0
        %970 = vmatprep.subr.bf16.mxu0 0
        %971 = vmatpush1.bf16.msra.mxu0 0
        %972 = vmatprep.subr.bf16.mxu0 0
        %973 = vmatpush1.bf16.msra.mxu0 0
        %974 = vmatprep.subr.bf16.mxu0 0
        %975 = vmatpush1.bf16.msra.mxu0 0
        %976 = vmatprep.subr.bf16.mxu0 0
        %977 = vmatpush1.bf16.msra.mxu0 0
        %978 = vmatprep.subr.bf16.mxu0 0
        %979 = vmatpush1.bf16.msra.mxu0 0
        %980 = vmatprep.subr.bf16.mxu0 0
        %981 = vmatpush1.bf16.msra.mxu0 %v964
        %982 = vmatprep.subr.bf16.mxu0 0
        %983 = vmatpush2.bf16.msra.mxu0 0
        %984 = vmatprep.subr.bf16.mxu0 0
        %985 = vmatpush2.bf16.msra.mxu0 0
        %986 = vmatprep.subr.bf16.mxu0 0
        %987 = vmatpush2.bf16.msra.mxu0 0
        %988 = vmatprep.subr.bf16.mxu0 0
        %989 = vmatpush2.bf16.msra.mxu0 0
        %990 = vmatprep.subr.bf16.mxu0 0
        %991 = vmatpush2.bf16.msra.mxu0 0
        %992 = vmatprep.subr.bf16.mxu0 0
        %993 = vmatpush2.bf16.msra.mxu0 0
        %994 = vmatprep.subr.bf16.mxu0 0
        %995 = vmatpush2.bf16.msra.mxu0 0
        %996 = vmatprep.subr.bf16.mxu0 0
        %997 = vmatpush2.bf16.msra.mxu0 0
        %998 = vmatprep.mubr.bf16.mxu0 0
        %999 = vmatmul.mubr.bf16.gmra.mxu0 %v961
        %v1000 = vpop.f32.mrf.mxu0
        %v1001 = vadd.f32 0.0, %v1000
        %v1002 = vpop.f32.mrf.mxu0
        %v1003 = vpop.f32.mrf.mxu0
        %v1004 = vpop.f32.mrf.mxu0
        %1005 = vdwg.mxu0
        %v1006 = vpack.c.bf16 %v1001, %v1001
        %v1008 = vunpack.c.l.b16 %v1006
        %v1009 = vpack.c.b16 %v1008, %v1008
        %1010 = vrot.lane.b32.xlu0 %v1009, 16
        %v1011 = vpop.permute.xlu0 %1010
        %vm1013 = vcmask 191616
        %1014 = vst.msk [vmem:[#allocation2] sm:$0xf] %vm1013, %v1011
        %1015 = vrot.lane.b32.xlu0 %v535, 104
        %v1016 = vpop.permute.xlu0 %1015
        %1017 = vrot.lane.b32.xlu0 %v598, 104
        %v1018 = vpop.permute.xlu0 %1017
        %v1020 = vsel %vm662, %v1016, 0
        %v1023 = vsel %vm662, %v1018, 0
        %1025 = vmatprep.subr.bf16.mxu0 0
        %1026 = vmatpush1.bf16.xpose.msra.mxu0 0
        %1027 = vmatprep.subr.bf16.mxu0 0
        %1028 = vmatpush1.bf16.xpose.msra.mxu0 0
        %1029 = vmatprep.subr.bf16.mxu0 0
        %1030 = vmatpush1.bf16.xpose.msra.mxu0 0
        %1031 = vmatprep.subr.bf16.mxu0 0
        %1032 = vmatpush1.bf16.xpose.msra.mxu0 0
        %1033 = vmatprep.subr.bf16.mxu0 0
        %1034 = vmatpush1.bf16.xpose.msra.mxu0 0
        %1035 = vmatprep.subr.bf16.mxu0 0
        %1036 = vmatpush1.bf16.xpose.msra.mxu0 0
        %1037 = vmatprep.subr.bf16.mxu0 0
        %1038 = vmatpush1.bf16.xpose.msra.mxu0 0
        %1039 = vmatprep.subr.bf16.mxu0 0
        %1040 = vmatpush1.bf16.xpose.msra.mxu0 %v1023
        %1041 = vmatprep.subr.bf16.mxu0 0
        %1042 = vmatpush2.bf16.xpose.msra.mxu0 0
        %1043 = vmatprep.subr.bf16.mxu0 0
        %1044 = vmatpush2.bf16.xpose.msra.mxu0 0
        %1045 = vmatprep.subr.bf16.mxu0 0
        %1046 = vmatpush2.bf16.xpose.msra.mxu0 0
        %1047 = vmatprep.subr.bf16.mxu0 0
        %1048 = vmatpush2.bf16.xpose.msra.mxu0 0
        %1049 = vmatprep.subr.bf16.mxu0 0
        %1050 = vmatpush2.bf16.xpose.msra.mxu0 0
        %1051 = vmatprep.subr.bf16.mxu0 0
        %1052 = vmatpush2.bf16.xpose.msra.mxu0 0
        %1053 = vmatprep.subr.bf16.mxu0 0
        %1054 = vmatpush2.bf16.xpose.msra.mxu0 0
        %1055 = vmatprep.subr.bf16.mxu0 0
        %1056 = vmatpush2.bf16.xpose.msra.mxu0 0
        %1057 = vmatprep.mubr.bf16.mxu0 0
        %1058 = vmatmul.mubr.bf16.gmra.mxu0 %v1020
        %v1059 = vpop.f32.mrf.mxu0
        %v1060 = vadd.f32 0.0, %v1059
        %v1061 = vpop.f32.mrf.mxu0
        %v1062 = vpop.f32.mrf.mxu0
        %v1063 = vpop.f32.mrf.mxu0
        %1064 = vdwg.mxu0
        %v1065 = vmul.f32 %v1060, 0.35355338
        %v1066 = vsel %vm662, %v1065, -inf
        %1067 = vmax.xlane.f32.xlu0 %v1066
        %v1068 = vpop.xlane.xlu0 %1067
        %v1069 = vsub.f32 %v1065, %v1068
        %v1070 = vmul.f32 %v1069, 1.442695
        %v1071 = vpow.pop %v1070
        %v1072 = vsel %vm662, %v1071, 0.0
        %1073 = vadd.xlane.f32.xlu0 %v1072
        %v1074 = vpop.xlane.xlu0 %1073
        %v1075 = vrcp.pop %v1074
        %v1076 = vmul.f32 %v1071, %v1075
        %v1077 = vpack.c.bf16 %v1076, %v1076
        %1078 = vrot.lane.b32.xlu0 %v661, 104
        %v1079 = vpop.permute.xlu0 %1078
        %v1081 = vsel %vm662, %v1077, 0
        %v1084 = vsel %vm725, %v1079, 0
        %1086 = vmatprep.subr.bf16.mxu0 0
        %1087 = vmatpush1.bf16.msra.mxu0 0
        %1088 = vmatprep.subr.bf16.mxu0 0
        %1089 = vmatpush1.bf16.msra.mxu0 0
        %1090 = vmatprep.subr.bf16.mxu0 0
        %1091 = vmatpush1.bf16.msra.mxu0 0
        %1092 = vmatprep.subr.bf16.mxu0 0
        %1093 = vmatpush1.bf16.msra.mxu0 0
        %1094 = vmatprep.subr.bf16.mxu0 0
        %1095 = vmatpush1.bf16.msra.mxu0 0
        %1096 = vmatprep.subr.bf16.mxu0 0
        %1097 = vmatpush1.bf16.msra.mxu0 0
        %1098 = vmatprep.subr.bf16.mxu0 0
        %1099 = vmatpush1.bf16.msra.mxu0 0
        %1100 = vmatprep.subr.bf16.mxu0 0
        %1101 = vmatpush1.bf16.msra.mxu0 %v1084
        %1102 = vmatprep.subr.bf16.mxu0 0
        %1103 = vmatpush2.bf16.msra.mxu0 0
        %1104 = vmatprep.subr.bf16.mxu0 0
        %1105 = vmatpush2.bf16.msra.mxu0 0
        %1106 = vmatprep.subr.bf16.mxu0 0
        %1107 = vmatpush2.bf16.msra.mxu0 0
        %1108 = vmatprep.subr.bf16.mxu0 0
        %1109 = vmatpush2.bf16.msra.mxu0 0
        %1110 = vmatprep.subr.bf16.mxu0 0
        %1111 = vmatpush2.bf16.msra.mxu0 0
        %1112 = vmatprep.subr.bf16.mxu0 0
        %1113 = vmatpush2.bf16.msra.mxu0 0
        %1114 = vmatprep.subr.bf16.mxu0 0
        %1115 = vmatpush2.bf16.msra.mxu0 0
        %1116 = vmatprep.subr.bf16.mxu0 0
        %1117 = vmatpush2.bf16.msra.mxu0 0
        %1118 = vmatprep.mubr.bf16.mxu0 0
        %1119 = vmatmul.mubr.bf16.gmra.mxu0 %v1081
        %v1120 = vpop.f32.mrf.mxu0
        %v1121 = vadd.f32 0.0, %v1120
        %v1122 = vpop.f32.mrf.mxu0
        %v1123 = vpop.f32.mrf.mxu0
        %v1124 = vpop.f32.mrf.mxu0
        %1125 = vdwg.mxu0
        %v1126 = vpack.c.bf16 %v1121, %v1121
        %v1128 = vunpack.c.l.b16 %v1126
        %v1129 = vpack.c.b16 %v1128, %v1128
        %1130 = vrot.lane.b32.xlu0 %v1129, 24
        %v1131 = vpop.permute.xlu0 %1130
        %vm1133 = vcmask 257216
        %1134 = vst.msk [vmem:[#allocation2] sm:$0xf] %vm1133, %v1131
        %v1135 = vld [vmem:[#allocation2] sm:$0xf]
        %v1136 = vld [vmem:[#allocation11] sm:$0xf]
        %v1137 = vld [vmem:[#allocation11 + $0x4] sm:$0xf]
        %v1138 = vld [vmem:[#allocation11 + $0x8] sm:$0xf]
        %v1139 = vld [vmem:[#allocation11 + $0xc] sm:$0xf]
        %v1141 = vlaneseq
        %v1142 = vshrl.u32 %v1141, 7
        %v1143 = vsub.s32 0, %v1142
        %v1144 = vrot.slane %v466, %v1143
        %v1150 = vunpack.c.l.b16 %v1136
        %v1151 = vunpack.c.l.b16 %v1137
        %v1152 = vunpack.c.l.b16 %v1138
        %v1153 = vunpack.c.l.b16 %v1139
        %v1154 = vpack.c.b16 %v1151, %v1150
        %v1155 = vpack.c.b16 %v1153, %v1152
        %v1159 = vsel %vm491, %v1135, 0
        %1161 = vmatprep.subr.bf16.mxu0 0
        %1162 = vmatpush1.bf16.msra.mxu0 0
        %1163 = vmatprep.subr.bf16.mxu0 0
        %1164 = vmatpush1.bf16.msra.mxu0 0
        %1165 = vmatprep.subr.bf16.mxu0 0
        %1166 = vmatpush1.bf16.msra.mxu0 0
        %1167 = vmatprep.subr.bf16.mxu0 0
        %1168 = vmatpush1.bf16.msra.mxu0 0
        %1169 = vmatprep.subr.bf16.mxu0 0
        %1170 = vmatpush1.bf16.msra.mxu0 0
        %1171 = vmatprep.subr.bf16.mxu0 0
        %1172 = vmatpush1.bf16.msra.mxu0 0
        %1173 = vmatprep.subr.bf16.mxu0 0
        %1174 = vmatpush1.bf16.msra.mxu0 %v1155
        %1175 = vmatprep.subr.bf16.mxu0 0
        %1176 = vmatpush1.bf16.msra.mxu0 %v1154
        %1177 = vmatprep.subr.bf16.mxu0 0
        %1178 = vmatpush2.bf16.msra.mxu0 0
        %1179 = vmatprep.subr.bf16.mxu0 0
        %1180 = vmatpush2.bf16.msra.mxu0 0
        %1181 = vmatprep.subr.bf16.mxu0 0
        %1182 = vmatpush2.bf16.msra.mxu0 0
        %1183 = vmatprep.subr.bf16.mxu0 0
        %1184 = vmatpush2.bf16.msra.mxu0 0
        %1185 = vmatprep.subr.bf16.mxu0 0
        %1186 = vmatpush2.bf16.msra.mxu0 0
        %1187 = vmatprep.subr.bf16.mxu0 0
        %1188 = vmatpush2.bf16.msra.mxu0 0
        %1189 = vmatprep.subr.bf16.mxu0 0
        %1190 = vmatpush2.bf16.msra.mxu0 0
        %1191 = vmatprep.subr.bf16.mxu0 0
        %1192 = vmatpush2.bf16.msra.mxu0 0
        %1193 = vmatprep.mubr.bf16.mxu0 0
        %1194 = vmatmul.mubr.bf16.gmra.mxu0 %v1159
        %v1195 = vpop.f32.mrf.mxu0
        %v1196 = vadd.f32 %v1144, %v1195
        %v1197 = vpop.f32.mrf.mxu0
        %v1198 = vpop.f32.mrf.mxu0
        %v1199 = vpop.f32.mrf.mxu0
        %1200 = vdwg.mxu0
        %v1201 = vadd.f32 %v1196, %v461
        %v1202 = vsel %vm491, %v1201, 0.0
        %1203 = vadd.xlane.f32.xlu0 %v1202
        %v1204 = vpop.xlane.xlu0 %1203
        %v1205 = vrcp.pop 32.0
        %v1206 = vmul.f32 %v1204, %v1205
        %v1207 = vsub.f32 %v1201, %v1206
        %v1208 = vmul.f32 %v1207, %v1207
        %v1209 = vsel %vm491, %v1208, 0.0
        %1210 = vadd.xlane.f32.xlu0 %v1209
        %v1211 = vpop.xlane.xlu0 %1210
        %v1212 = vmul.f32 %v1211, %v1205
        %v1213 = vadd.f32 %v1212, 1e-12
        %v1214 = vrsqrt.pop %v1213
        %v1215 = vmul.f32 %v1207, %v1214
        %v1217 = vlaneseq
        %v1218 = vshrl.u32 %v1217, 7
        %v1219 = vsub.s32 0, %v1218
        %v1220 = vrot.slane %v467, %v1219
        %v1222 = vmul.f32 %v1215, %v1220
        %v1224 = vlaneseq
        %v1225 = vshrl.u32 %v1224, 7
        %v1226 = vsub.s32 0, %v1225
        %v1227 = vrot.slane %v468, %v1226
        %v1229 = vadd.f32 %v1222, %v1227
        %1230 = vst.msk [vmem:[%s459] sm:$0xff] %vm491, %v1229
        %s1231 = sand.u32 %s274, 1
        %s1232 = scalar_lea.sflag [#allocation5], %s1231
        %s1233 = sand.u32 %s274, 1
        %s1234 = smul.addr %s1233, 8
        %s1235 = scalar_lea.vmem [#allocation12], %s1234
        // Predicated region
        $region85: #{tpu_custom_call.1} parent=63 // pred_check
          %p1236 = pneg %p284
        $region86: #{tpu_custom_call.1} parent=63 // pred_check_branch
          %1238 = sbr.rel (%p1236) target = $region88
        $region87: #{tpu_custom_call.1} parent=63 // pred_region
          %s1240 = ssub.s32 128, 128
          %1241 = vsyncadd %s1232, %s1240
          %s1242 = smul.addr %s30, 128
          %s1243 = scalar_lea.hbm %s11, %s1242
          %s1245 = sshll.u32 %s1235, 4
          %s1246 = int_to_ptr.vmem [resolvable:$true] %s1245
          %1248 = dma.vmem_to_hbm [thread:$0]  %s1246, 128, %s1243, %s1232
        $region88: #{tpu_custom_call.1} parent=63 // pred_fallthru
          _
      $region64: #{tpu_custom_call.1} parent=5 // pred_fallthru
        _
      %p1249 = scmp.le.s32.totalorder 2, %s25
      // Predicated region
      $region89: #{tpu_custom_call.1} parent=5 // pred_check
        %p1250 = pneg %p1249
      $region90: #{tpu_custom_call.1} parent=5 // pred_check_branch
        %1252 = sbr.rel (%p1250) target = $region92
      $region91: #{tpu_custom_call.1} parent=5 // pred_region
        %s1253 = ssub.s32 %s25, 2
        // Predicated region
        $region93: #{tpu_custom_call.1} parent=91 // pred_check
          %p1254 = pneg %p290
        $region94: #{tpu_custom_call.1} parent=91 // pred_check_branch
          %1256 = sbr.rel (%p1254) target = $region96
        $region95: #{tpu_custom_call.1} parent=91 // pred_region
          %s1257 = sand.u32 %s275, 1
          %s1258 = scalar_lea.sflag [#allocation5], %s1257
          %s1259 = sand.u32 %s275, 1
          %s1260 = smul.addr %s1259, 8
          %s1261 = scalar_lea.vmem [#allocation12], %s1260
          %1262 = dma.done %s1258, 128
        $region96: #{tpu_custom_call.1} parent=91 // pred_fallthru
          _
      $region92: #{tpu_custom_call.1} parent=5 // pred_fallthru
        _
    $region6: #{tpu_custom_call.1} parent=1 // loop_footer
      %s29 = sadd.s32 1, %s25
    $region7: #{tpu_custom_call.1} parent=1 // loop_footer_branch
      %24 = sbr.rel target = $region3
    $region8: #{tpu_custom_call.1} parent=1 // loop_exit
      _
    %1263 = vsyncpa [#allocation4], 1
    %s1264 = scalar_lea.sflag [#allocation4], 1
    %1265 = vsyncpa %s1264, 1
    %1266 = vsyncpa [#allocation7], 1
    %1267 = vsyncpa [#allocation10], 1
    %1268 = vsyncpa [#allocation5], 1
    %s1269 = scalar_lea.sflag [#allocation5], 1
    %1270 = vsyncpa %s1269, 1

</llo_original>
